<compile_context>
chip_gen: v7x
topology: tpu7x:2x2x1
jax: 0.10.0
libtpu: 0.0.40
codegen_flags: <defaults>
</compile_context>

<pallas_src>
import jax
import jax.numpy as jnp
from jax.experimental import pallas as pl
from jax.experimental.pallas import tpu as pltpu


def _round_up(n, m):
    return ((n + m - 1) // m) * m


def _vae_kernel(x_ref, eps_ref,
                w1_ref, b1_ref,
                w2_ref, b2_ref,     # fused fc21|fc22: (400, 40) / (1, 40)
                w3_ref, b3_ref,
                w4_ref, b4_ref,
                recon_ref, mulv_ref):
    """One batch tile of the whole VAE forward.

    MXU operands are bf16, accumulation is f32 (preferred_element_type),
    elementwise math stays f32 (VPU/EUP).
    """
    # x arrives as f32 (single HBM pass); cast to bf16 on the VPU (cheap filler).
    x = x_ref[...].astype(jnp.bfloat16)                           # (tb, 784)

    # encode: h1 = relu(x @ W1 + b1)
    h1 = jnp.dot(x, w1_ref[...], preferred_element_type=jnp.float32) + b1_ref[...]
    h1 = jnp.maximum(h1, 0.0)                                     # (tb, 400) f32

    # fused mu|logvar: one (400, 40) matmul instead of two 20-wide passes
    mulv = jnp.dot(h1.astype(jnp.bfloat16), w2_ref[...],
                   preferred_element_type=jnp.float32) + b2_ref[...]   # (tb, 40)
    mu = mulv[:, :20]
    logvar = mulv[:, 20:]

    # reparameterize: z = mu + eps * exp(0.5 * logvar)
    z = mu + eps_ref[...] * jnp.exp(0.5 * logvar)                 # (tb, 20) f32

    # decode: h3 = relu(z @ W3 + b3); recon = sigmoid(h3 @ W4 + b4)
    h3 = jnp.dot(z.astype(jnp.bfloat16), w3_ref[...],
                 preferred_element_type=jnp.float32) + b3_ref[...]
    h3 = jnp.maximum(h3, 0.0)                                     # (tb, 400) f32
    logits = jnp.dot(h3.astype(jnp.bfloat16), w4_ref[...],
                     preferred_element_type=jnp.float32) + b4_ref[...]

    # single-transcendental sigmoid (one EUP push per vreg), naturally in [0,1]
    recon = 0.5 * (jnp.tanh(0.5 * logits) + 1.0)
    recon_ref[...] = recon.astype(recon_ref.dtype)                # bf16 store
    mulv_ref[...] = mulv                                          # f32 (keep precision)


def _prep_params(params):
    """f32 master params -> (bf16 weights, f32 biases), fc21|fc22 fused.

    NOTE: if importing real PyTorch weights, nn.Linear stores weight as
    (out, in) and bias as (out,); transpose weights and reshape biases to
    (1, out) before passing them here.
    """
    w1, b1, w21, b21, w22, b22, w3, b3, w4, b4 = params
    bf = jnp.bfloat16
    w2 = jnp.concatenate([w21, w22], axis=1)     # (400, 40)
    b2 = jnp.concatenate([b21, b22], axis=1)     # (1, 40)
    return (w1.astype(bf), b1.astype(jnp.float32),
            w2.astype(bf), b2.astype(jnp.float32),
            w3.astype(bf), b3.astype(jnp.float32),
            w4.astype(bf), b4.astype(jnp.float32))


def vae_forward(x_nchw, eps, params, *, recon_dtype=jnp.bfloat16):
    """x_nchw: (B, 1, 28, 28) f32. eps: (B, 20) f32 reparameterization noise.

    Returns (recon (B, 784) recon_dtype, mu (B, 20) f32, logvar (B, 20) f32),
    matching the PyTorch module's forward (flattened reconstruction).
    """
    B = x_nchw.shape[0]
    x = x_nchw.reshape(B, 784).astype(jnp.float32)   # == torch x.view(-1, 784)
    eps = eps.astype(jnp.float32)

    # Batch tiling: cap 512, multiples of 16 (bf16 sublane packing), and aim
    # for >= 2 grid programs so v7x's 2 TensorCores both get work. For tiny B,
    # one block whose dims equal the array dims (always layout-legal).
    if B <= 32:
        tile_b = B
    else:
        tile_b = min(512, _round_up(pl.cdiv(B, 2), 16))
    grid = (pl.cdiv(B, tile_b),)   # ragged last tile handled by Pallas; no jnp.pad

    w1, b1, w2, b2, w3, b3, w4, b4 = _prep_params(params)

    # Weights/biases: pinned to block (0, 0) -> VMEM-resident across the grid.
    def pinned(shape):
        return pl.BlockSpec(shape, lambda i: (0, 0))

    in_specs = [
        pl.BlockSpec((tile_b, 784), lambda i: (i, 0)),   # x (f32, cast in kernel)
        pl.BlockSpec((tile_b, 20), lambda i: (i, 0)),    # eps
        pinned((784, 400)), pinned((1, 400)),            # fc1
        pinned((400, 40)), pinned((1, 40)),              # fused fc21|fc22
        pinned((20, 400)), pinned((1, 400)),             # fc3
        pinned((400, 784)), pinned((1, 784)),            # fc4
    ]
    out_specs = (
        pl.BlockSpec((tile_b, 784), lambda i: (i, 0)),   # recon (bf16)
        pl.BlockSpec((tile_b, 40), lambda i: (i, 0)),    # mu|logvar slab (f32)
    )

    recon, mulv = pl.pallas_call(
        _vae_kernel,
        grid=grid,
        in_specs=in_specs,
        out_specs=out_specs,
        out_shape=(
            jax.ShapeDtypeStruct((B, 784), recon_dtype),
            jax.ShapeDtypeStruct((B, 40), jnp.float32),
        ),
        compiler_params=pltpu.CompilerParams(
            dimension_semantics=("parallel",),   # megacore split on v7x
        ),
    )(x, eps, w1, b1, w2, b2, w3, b3, w4, b4)

    return recon, mulv[:, :20], mulv[:, 20:]


def init_params(key):
    """Deterministic init mirroring nn.Linear's U(-1/sqrt(fan_in), ..) but in
    (in, out) weight layout for `x @ W`."""
    def linear(k, fan_in, fan_out):
        kw, kb = jax.random.split(k)
        bound = 1.0 / jnp.sqrt(fan_in)
        w = jax.random.uniform(kw, (fan_in, fan_out), jnp.float32, -bound, bound)
        b = jax.random.uniform(kb, (1, fan_out), jnp.float32, -bound, bound)
        return w, b

    k1, k2, k3, k4, k5 = jax.random.split(key, 5)
    w1, b1 = linear(k1, 784, 400)    # fc1
    w21, b21 = linear(k2, 400, 20)   # fc21 (mu)
    w22, b22 = linear(k3, 400, 20)   # fc22 (logvar)
    w3, b3 = linear(k4, 20, 400)     # fc3
    w4, b4 = linear(k5, 400, 784)    # fc4
    return (w1, b1, w21, b21, w22, b22, w3, b3, w4, b4)


def vae_ref(x_nchw, eps, params):
    """Plain-JAX reference mirroring the kernel's bf16 matmul inputs
    (f32 accumulation + f32 elementwise), for correctness checking."""
    w1, b1, w21, b21, w22, b22, w3, b3, w4, b4 = params
    bf = jnp.bfloat16

    def bdot(a, w):
        return jnp.dot(a.astype(bf), w.astype(bf),
                       preferred_element_type=jnp.float32)

    x = x_nchw.reshape(x_nchw.shape[0], 784).astype(jnp.float32)
    h1 = jnp.maximum(bdot(x, w1) + b1, 0.0)
    mu = bdot(h1, w21) + b21
    logvar = bdot(h1, w22) + b22
    z = mu + eps * jnp.exp(0.5 * logvar)
    h3 = jnp.maximum(bdot(z, w3) + b3, 0.0)
    recon = jax.nn.sigmoid(bdot(h3, w4) + b4)
    return recon, mu, logvar


if __name__ == "__main__":
    key = jax.random.PRNGKey(0)
    k_param, k_x, k_eps = jax.random.split(key, 3)

    B = 8
    x = jax.random.uniform(k_x, (B, 1, 28, 28), jnp.float32)   # MNIST-like input
    eps = jax.random.normal(k_eps, (B, 20), jnp.float32)       # torch.randn_like(std)
    params = init_params(k_param)

    recon, mu, logvar = vae_forward(x, eps, params)
    jax.block_until_ready((recon, mu, logvar))

    # sanity check vs plain-JAX reference (bf16-matmul-matched; recon is
    # stored in bf16 -> slightly looser tolerance there)
    r_ref, mu_r, lv_r = vae_ref(x, eps, params)
    assert recon.shape == (B, 784) and mu.shape == (B, 20) and logvar.shape == (B, 20)
    assert jnp.allclose(mu, mu_r, atol=1e-2, rtol=1e-2)
    assert jnp.allclose(logvar, lv_r, atol=1e-2, rtol=1e-2)
    assert jnp.allclose(recon.astype(jnp.float32), r_ref, atol=2e-2, rtol=2e-2)
    assert bool(jnp.all((recon >= 0.0) & (recon <= 1.0)))   # BCE-safe sigmoid

    print("KERNEL_OK")
</pallas_src>

<mosaic_0001>
module attributes {stable_mosaic.version = 11 : i64} {
  func.func @_vae_kernel(%arg0: i32, %arg1: memref<8x784xf32, #tpu.memory_space<vmem>>, %arg2: memref<8x20xf32, #tpu.memory_space<vmem>>, %arg3: memref<784x400xbf16, #tpu.memory_space<vmem>>, %arg4: memref<1x400xf32, #tpu.memory_space<vmem>>, %arg5: memref<400x40xbf16, #tpu.memory_space<vmem>>, %arg6: memref<1x40xf32, #tpu.memory_space<vmem>>, %arg7: memref<20x400xbf16, #tpu.memory_space<vmem>>, %arg8: memref<1x400xf32, #tpu.memory_space<vmem>>, %arg9: memref<400x784xbf16, #tpu.memory_space<vmem>>, %arg10: memref<1x784xf32, #tpu.memory_space<vmem>>, %arg11: memref<8x784xbf16, #tpu.memory_space<vmem>>, %arg12: memref<8x40xf32, #tpu.memory_space<vmem>>) attributes {dimension_semantics = [#tpu.dimension_semantics<parallel>], iteration_bounds = array<i64: 1>, scalar_prefetch = 0 : i64, scratch_operands = 0 : i64, tpu.core_type = #tpu.core_type<tc>, window_params = [{transform_indices = @transform_0, window_bounds = array<i64: 8, 784>}, {transform_indices = @transform_1, window_bounds = array<i64: 8, 20>}, {pipeline_mode = #tpu.pipeline_mode<synchronous>, transform_indices = @transform_2, window_bounds = array<i64: 784, 400>}, {pipeline_mode = #tpu.pipeline_mode<synchronous>, transform_indices = @transform_3, window_bounds = array<i64: 1, 400>}, {pipeline_mode = #tpu.pipeline_mode<synchronous>, transform_indices = @transform_4, window_bounds = array<i64: 400, 40>}, {pipeline_mode = #tpu.pipeline_mode<synchronous>, transform_indices = @transform_5, window_bounds = array<i64: 1, 40>}, {pipeline_mode = #tpu.pipeline_mode<synchronous>, transform_indices = @transform_6, window_bounds = array<i64: 20, 400>}, {pipeline_mode = #tpu.pipeline_mode<synchronous>, transform_indices = @transform_7, window_bounds = array<i64: 1, 400>}, {pipeline_mode = #tpu.pipeline_mode<synchronous>, transform_indices = @transform_8, window_bounds = array<i64: 400, 784>}, {pipeline_mode = #tpu.pipeline_mode<synchronous>, transform_indices = @transform_9, window_bounds = array<i64: 1, 784>}, {transform_indices = @transform_10, window_bounds = array<i64: 8, 784>}, {transform_indices = @transform_11, window_bounds = array<i64: 8, 40>}]} {
    %c0 = arith.constant 0 : index
    %c0_0 = arith.constant 0 : index
    %0 = vector.load %arg1[%c0, %c0_0] : memref<8x784xf32, #tpu.memory_space<vmem>>, vector<8x784xf32>
    %1 = arith.truncf %0 : vector<8x784xf32> to vector<8x784xbf16>
    %c0_1 = arith.constant 0 : index
    %c0_2 = arith.constant 0 : index
    %2 = vector.load %arg3[%c0_1, %c0_2] : memref<784x400xbf16, #tpu.memory_space<vmem>>, vector<784x400xbf16>
    %cst = arith.constant dense<0.000000e+00> : vector<8x400xf32>
    %3 = tpu.matmul %1, %2, %cst {dimension_numbers = #tpu.dot_dimension_numbers<[1], [0], [0], [1], [0, 0, 1, 1], [], []>} : vector<8x784xbf16>, vector<784x400xbf16>, vector<8x400xf32> -> vector<8x400xf32>
    %c0_3 = arith.constant 0 : index
    %c0_4 = arith.constant 0 : index
    %4 = vector.load %arg4[%c0_3, %c0_4] : memref<1x400xf32, #tpu.memory_space<vmem>>, vector<1x400xf32>
    %5 = vector.broadcast %4 : vector<1x400xf32> to vector<8x400xf32>
    %6 = arith.addf %3, %5 : vector<8x400xf32>
    %cst_5 = arith.constant 0.000000e+00 : f32
    %7 = vector.broadcast %cst_5 : f32 to vector<8x400xf32>
    %8 = arith.maximumf %6, %7 : vector<8x400xf32>
    %9 = arith.truncf %8 : vector<8x400xf32> to vector<8x400xbf16>
    %c0_6 = arith.constant 0 : index
    %c0_7 = arith.constant 0 : index
    %10 = vector.load %arg5[%c0_6, %c0_7] : memref<400x40xbf16, #tpu.memory_space<vmem>>, vector<400x40xbf16>
    %cst_8 = arith.constant dense<0.000000e+00> : vector<8x40xf32>
    %11 = tpu.matmul %9, %10, %cst_8 {dimension_numbers = #tpu.dot_dimension_numbers<[1], [0], [0], [1], [0, 0, 1, 1], [], []>} : vector<8x400xbf16>, vector<400x40xbf16>, vector<8x40xf32> -> vector<8x40xf32>
    %c0_9 = arith.constant 0 : index
    %c0_10 = arith.constant 0 : index
    %12 = vector.load %arg6[%c0_9, %c0_10] : memref<1x40xf32, #tpu.memory_space<vmem>>, vector<1x40xf32>
    %13 = vector.broadcast %12 : vector<1x40xf32> to vector<8x40xf32>
    %14 = arith.addf %11, %13 : vector<8x40xf32>
    %15 = vector.extract_strided_slice %14 {offsets = [0, 0], sizes = [8, 20], strides = [1, 1]} : vector<8x40xf32> to vector<8x20xf32>
    %16 = vector.extract_strided_slice %14 {offsets = [0, 20], sizes = [8, 20], strides = [1, 1]} : vector<8x40xf32> to vector<8x20xf32>
    %c0_11 = arith.constant 0 : index
    %c0_12 = arith.constant 0 : index
    %17 = vector.load %arg2[%c0_11, %c0_12] : memref<8x20xf32, #tpu.memory_space<vmem>>, vector<8x20xf32>
    %cst_13 = arith.constant 5.000000e-01 : f32
    %18 = vector.broadcast %cst_13 : f32 to vector<8x20xf32>
    %19 = arith.mulf %18, %16 : vector<8x20xf32>
    %20 = math.exp %19 : vector<8x20xf32>
    %21 = arith.mulf %17, %20 : vector<8x20xf32>
    %22 = arith.addf %15, %21 : vector<8x20xf32>
    %23 = arith.truncf %22 : vector<8x20xf32> to vector<8x20xbf16>
    %c0_14 = arith.constant 0 : index
    %c0_15 = arith.constant 0 : index
    %24 = vector.load %arg7[%c0_14, %c0_15] : memref<20x400xbf16, #tpu.memory_space<vmem>>, vector<20x400xbf16>
    %cst_16 = arith.constant dense<0.000000e+00> : vector<8x400xf32>
    %25 = tpu.matmul %23, %24, %cst_16 {dimension_numbers = #tpu.dot_dimension_numbers<[1], [0], [0], [1], [0, 0, 1, 1], [], []>} : vector<8x20xbf16>, vector<20x400xbf16>, vector<8x400xf32> -> vector<8x400xf32>
    %c0_17 = arith.constant 0 : index
    %c0_18 = arith.constant 0 : index
    %26 = vector.load %arg8[%c0_17, %c0_18] : memref<1x400xf32, #tpu.memory_space<vmem>>, vector<1x400xf32>
    %27 = vector.broadcast %26 : vector<1x400xf32> to vector<8x400xf32>
    %28 = arith.addf %25, %27 : vector<8x400xf32>
    %cst_19 = arith.constant 0.000000e+00 : f32
    %29 = vector.broadcast %cst_19 : f32 to vector<8x400xf32>
    %30 = arith.maximumf %28, %29 : vector<8x400xf32>
    %31 = arith.truncf %30 : vector<8x400xf32> to vector<8x400xbf16>
    %c0_20 = arith.constant 0 : index
    %c0_21 = arith.constant 0 : index
    %32 = vector.load %arg9[%c0_20, %c0_21] : memref<400x784xbf16, #tpu.memory_space<vmem>>, vector<400x784xbf16>
    %cst_22 = arith.constant dense<0.000000e+00> : vector<8x784xf32>
    %33 = tpu.matmul %31, %32, %cst_22 {dimension_numbers = #tpu.dot_dimension_numbers<[1], [0], [0], [1], [0, 0, 1, 1], [], []>} : vector<8x400xbf16>, vector<400x784xbf16>, vector<8x784xf32> -> vector<8x784xf32>
    %c0_23 = arith.constant 0 : index
    %c0_24 = arith.constant 0 : index
    %34 = vector.load %arg10[%c0_23, %c0_24] : memref<1x784xf32, #tpu.memory_space<vmem>>, vector<1x784xf32>
    %35 = vector.broadcast %34 : vector<1x784xf32> to vector<8x784xf32>
    %36 = arith.addf %33, %35 : vector<8x784xf32>
    %cst_25 = arith.constant 5.000000e-01 : f32
    %37 = vector.broadcast %cst_25 : f32 to vector<8x784xf32>
    %38 = arith.mulf %37, %36 : vector<8x784xf32>
    %39 = math.tanh %38 : vector<8x784xf32>
    %cst_26 = arith.constant 1.000000e+00 : f32
    %40 = vector.broadcast %cst_26 : f32 to vector<8x784xf32>
    %41 = arith.addf %39, %40 : vector<8x784xf32>
    %cst_27 = arith.constant 5.000000e-01 : f32
    %42 = vector.broadcast %cst_27 : f32 to vector<8x784xf32>
    %43 = arith.mulf %42, %41 : vector<8x784xf32>
    %44 = arith.truncf %43 : vector<8x784xf32> to vector<8x784xbf16>
    %c0_28 = arith.constant 0 : index
    %c0_29 = arith.constant 0 : index
    %45 = vector.load %arg11[%c0_28, %c0_29] : memref<8x784xbf16, #tpu.memory_space<vmem>>, vector<8x784xbf16>
    tpu.vector_store %arg11[%c0_28, %c0_29], %44 {strides = array<i32>} : memref<8x784xbf16, #tpu.memory_space<vmem>>, vector<8x784xbf16>,
    %c0_30 = arith.constant 0 : index
    %c0_31 = arith.constant 0 : index
    %46 = vector.load %arg12[%c0_30, %c0_31] : memref<8x40xf32, #tpu.memory_space<vmem>>, vector<8x40xf32>
    tpu.vector_store %arg12[%c0_30, %c0_31], %14 {strides = array<i32>} : memref<8x40xf32, #tpu.memory_space<vmem>>, vector<8x40xf32>,
    return
  }
  func.func @transform_0(%arg0: i32) -> (i32, i32) {
    %c0_i32 = arith.constant 0 : i32
    %c0_i32_0 = arith.constant 0 : i32
    return %arg0, %c0_i32 : i32, i32
  }
  func.func @transform_1(%arg0: i32) -> (i32, i32) {
    %c0_i32 = arith.constant 0 : i32
    %c0_i32_0 = arith.constant 0 : i32
    return %arg0, %c0_i32 : i32, i32
  }
  func.func @transform_2(%arg0: i32) -> (i32, i32) {
    %c0_i32 = arith.constant 0 : i32
    %c0_i32_0 = arith.constant 0 : i32
    %c0_i32_1 = arith.constant 0 : i32
    return %c0_i32, %c0_i32_0 : i32, i32
  }
  func.func @transform_3(%arg0: i32) -> (i32, i32) {
    %c0_i32 = arith.constant 0 : i32
    %c0_i32_0 = arith.constant 0 : i32
    %c0_i32_1 = arith.constant 0 : i32
    return %c0_i32, %c0_i32_0 : i32, i32
  }
  func.func @transform_4(%arg0: i32) -> (i32, i32) {
    %c0_i32 = arith.constant 0 : i32
    %c0_i32_0 = arith.constant 0 : i32
    %c0_i32_1 = arith.constant 0 : i32
    return %c0_i32, %c0_i32_0 : i32, i32
  }
  func.func @transform_5(%arg0: i32) -> (i32, i32) {
    %c0_i32 = arith.constant 0 : i32
    %c0_i32_0 = arith.constant 0 : i32
    %c0_i32_1 = arith.constant 0 : i32
    return %c0_i32, %c0_i32_0 : i32, i32
  }
  func.func @transform_6(%arg0: i32) -> (i32, i32) {
    %c0_i32 = arith.constant 0 : i32
    %c0_i32_0 = arith.constant 0 : i32
    %c0_i32_1 = arith.constant 0 : i32
    return %c0_i32, %c0_i32_0 : i32, i32
  }
  func.func @transform_7(%arg0: i32) -> (i32, i32) {
    %c0_i32 = arith.constant 0 : i32
    %c0_i32_0 = arith.constant 0 : i32
    %c0_i32_1 = arith.constant 0 : i32
    return %c0_i32, %c0_i32_0 : i32, i32
  }
  func.func @transform_8(%arg0: i32) -> (i32, i32) {
    %c0_i32 = arith.constant 0 : i32
    %c0_i32_0 = arith.constant 0 : i32
    %c0_i32_1 = arith.constant 0 : i32
    return %c0_i32, %c0_i32_0 : i32, i32
  }
  func.func @transform_9(%arg0: i32) -> (i32, i32) {
    %c0_i32 = arith.constant 0 : i32
    %c0_i32_0 = arith.constant 0 : i32
    %c0_i32_1 = arith.constant 0 : i32
    return %c0_i32, %c0_i32_0 : i32, i32
  }
  func.func @transform_10(%arg0: i32) -> (i32, i32) {
    %c0_i32 = arith.constant 0 : i32
    %c0_i32_0 = arith.constant 0 : i32
    return %arg0, %c0_i32 : i32, i32
  }
  func.func @transform_11(%arg0: i32) -> (i32, i32) {
    %c0_i32 = arith.constant 0 : i32
    %c0_i32_0 = arith.constant 0 : i32
    return %arg0, %c0_i32 : i32, i32
  }
}

</mosaic_0001>

<llo_original>
// kernel: tpu_custom_call.1
$region0: #{tpu_custom_call.1}
  #allocation0 [shape = 'u32[]', space=smem, size = 0x4, offset = 0x4, fixed_abs, tag = 'smem constant byte address 0x4 - core index']
  #allocation1 [shape = 'u32[144,128]{1,0:T(1,128)}', space=vmem, size = 0x12000, scoped, tag = 'internal scratch']
  %s0 = inlined_call_operand.vmem [shape: f32[8,784], index: 0, kind: input, shape index: {}]
  %s1 = inlined_call_operand.vmem [shape: f32[8,20], index: 1, kind: input, shape index: {}]
  %s2 = inlined_call_operand.vmem [shape: bf16[784,400], index: 2, kind: input, shape index: {}]
  %s3 = inlined_call_operand.vmem [shape: f32[1,400], index: 3, kind: input, shape index: {}]
  %s4 = inlined_call_operand.vmem [shape: bf16[400,40], index: 4, kind: input, shape index: {}]
  %s5 = inlined_call_operand.vmem [shape: f32[1,40], index: 5, kind: input, shape index: {}]
  %s6 = inlined_call_operand.vmem [shape: bf16[20,400], index: 6, kind: input, shape index: {}]
  %s7 = inlined_call_operand.vmem [shape: f32[1,400], index: 7, kind: input, shape index: {}]
  %s8 = inlined_call_operand.vmem [shape: bf16[400,784], index: 8, kind: input, shape index: {}]
  %s9 = inlined_call_operand.vmem [shape: f32[1,784], index: 9, kind: input, shape index: {}]
  %s10 = inlined_call_operand.hbm [shape: bf16[8,784], index: 10, kind: output, shape index: {0}]
  %s11 = inlined_call_operand.hbm [shape: f32[8,40], index: 11, kind: output, shape index: {1}]
  %12 = xla_tuple %s10, %s11
  %s13 = sld [smem:[#allocation0]]
  $region58: #{tpu_custom_call.1} parent=0
    _
  %s15 = ssub.s32 1, %s13
  %s16 = scalar_select 0, %s15, %s13
  $region1: #{tpu_custom_call.1} parent=0
    #allocation2 [shape = 'u8[14336]{0}', space=vmem, size = 0x3800, scoped, tag = 'output window, operand 0, single buffered']
    #allocation3 [shape = 's32[1]{0}', space=sflag, size = 0x4, scoped, tag = 'scoped memory for tpu_custom_call.1']
    #allocation4 [shape = 'u8[4096]{0}', space=vmem, size = 0x1000, scoped, tag = 'output window, operand 1, single buffered']
    #allocation5 [shape = 's32[1]{0}', space=sflag, size = 0x4, scoped, tag = 'scoped memory for tpu_custom_call.1']
    %17 = vsyncpa [#allocation3], 0
    %18 = vsyncpa [#allocation5], 0
    // Predicated region
    $region2: #{tpu_custom_call.1} parent=1 // pred_check
      _
    $region3: #{tpu_custom_call.1} parent=1 // pred_check_branch
      %20 = sbr.rel (0) target = $region5
    $region4: #{tpu_custom_call.1} parent=1 // pred_region
      _
    $region5: #{tpu_custom_call.1} parent=1 // pred_fallthru
      _
    // Predicated region
    $region6: #{tpu_custom_call.1} parent=1 // pred_check
      _
    $region7: #{tpu_custom_call.1} parent=1 // pred_check_branch
      %22 = sbr.rel (0) target = $region9
    $region8: #{tpu_custom_call.1} parent=1 // pred_region
      _
    $region9: #{tpu_custom_call.1} parent=1 // pred_fallthru
      _
    // Predicated region
    $region10: #{tpu_custom_call.1} parent=1 // pred_check
      _
    $region11: #{tpu_custom_call.1} parent=1 // pred_check_branch
      %24 = sbr.rel (0) target = $region13
    $region12: #{tpu_custom_call.1} parent=1 // pred_region
      _
    $region13: #{tpu_custom_call.1} parent=1 // pred_fallthru
      _
    // Predicated region
    $region14: #{tpu_custom_call.1} parent=1 // pred_check
      _
    $region15: #{tpu_custom_call.1} parent=1 // pred_check_branch
      %26 = sbr.rel (0) target = $region17
    $region16: #{tpu_custom_call.1} parent=1 // pred_region
      _
    $region17: #{tpu_custom_call.1} parent=1 // pred_fallthru
      _
    // Predicated region
    $region18: #{tpu_custom_call.1} parent=1 // pred_check
      _
    $region19: #{tpu_custom_call.1} parent=1 // pred_check_branch
      %28 = sbr.rel (0) target = $region21
    $region20: #{tpu_custom_call.1} parent=1 // pred_region
      _
    $region21: #{tpu_custom_call.1} parent=1 // pred_fallthru
      _
    // Predicated region
    $region22: #{tpu_custom_call.1} parent=1 // pred_check
      _
    $region23: #{tpu_custom_call.1} parent=1 // pred_check_branch
      %30 = sbr.rel (0) target = $region25
    $region24: #{tpu_custom_call.1} parent=1 // pred_region
      _
    $region25: #{tpu_custom_call.1} parent=1 // pred_fallthru
      _
    // Predicated region
    $region26: #{tpu_custom_call.1} parent=1 // pred_check
      _
    $region27: #{tpu_custom_call.1} parent=1 // pred_check_branch
      %32 = sbr.rel (0) target = $region29
    $region28: #{tpu_custom_call.1} parent=1 // pred_region
      _
    $region29: #{tpu_custom_call.1} parent=1 // pred_fallthru
      _
    // Predicated region
    $region30: #{tpu_custom_call.1} parent=1 // pred_check
      _
    $region31: #{tpu_custom_call.1} parent=1 // pred_check_branch
      %34 = sbr.rel (0) target = $region33
    $region32: #{tpu_custom_call.1} parent=1 // pred_region
      _
    $region33: #{tpu_custom_call.1} parent=1 // pred_fallthru
      _
    // Predicated region
    $region34: #{tpu_custom_call.1} parent=1 // pred_check
      _
    $region35: #{tpu_custom_call.1} parent=1 // pred_check_branch
      %36 = sbr.rel (0) target = $region37
    $region36: #{tpu_custom_call.1} parent=1 // pred_region
      _
    $region37: #{tpu_custom_call.1} parent=1 // pred_fallthru
      _
    // Predicated region
    $region38: #{tpu_custom_call.1} parent=1 // pred_check
      _
    $region39: #{tpu_custom_call.1} parent=1 // pred_check_branch
      %38 = sbr.rel (0) target = $region41
    $region40: #{tpu_custom_call.1} parent=1 // pred_region
      _
    $region41: #{tpu_custom_call.1} parent=1 // pred_fallthru
      _
    %v40 = vld [vmem:[%s0] sm:$0xff]
    %v41 = vld [vmem:[%s0 + $0x8] sm:$0xff]
    %v42 = vld [vmem:[%s0 + $0x10] sm:$0xff]
    %v43 = vld [vmem:[%s0 + $0x18] sm:$0xff]
    %v44 = vld [vmem:[%s0 + $0x20] sm:$0xff]
    %v45 = vld [vmem:[%s0 + $0x28] sm:$0xff]
    %v46 = vld [vmem:[%s0 + $0x30] sm:$0xff]
    %v47 = vpack.c.bf16 %v40, %v40
    %v48 = vpack.c.bf16 %v41, %v41
    %v49 = vpack.c.bf16 %v42, %v42
    %v50 = vpack.c.bf16 %v43, %v43
    %v51 = vpack.c.bf16 %v44, %v44
    %v52 = vpack.c.bf16 %v45, %v45
    %v53 = vpack.c.bf16 %v46, %v46
    %v54 = vld [vmem:[%s2] sm:$0xff]
    %v55 = vld [vmem:[%s2 + $0x8] sm:$0xff]
    %v56 = vld [vmem:[%s2 + $0x10] sm:$0xff]
    %v57 = vld [vmem:[%s2 + $0x18] sm:$0xff]
    %v58 = vld [vmem:[%s2 + $0x20] sm:$0xff]
    %v59 = vld [vmem:[%s2 + $0x28] sm:$0xff]
    %v60 = vld [vmem:[%s2 + $0x30] sm:$0xff]
    %v61 = vld [vmem:[%s2 + $0x38] sm:$0xff]
    %v62 = vld [vmem:[%s2 + $0x40] sm:$0xff]
    %v63 = vld [vmem:[%s2 + $0x48] sm:$0xff]
    %v64 = vld [vmem:[%s2 + $0x50] sm:$0xff]
    %v65 = vld [vmem:[%s2 + $0x58] sm:$0xff]
    %v66 = vld [vmem:[%s2 + $0x60] sm:$0xff]
    %v67 = vld [vmem:[%s2 + $0x68] sm:$0xff]
    %v68 = vld [vmem:[%s2 + $0x70] sm:$0xff]
    %v69 = vld [vmem:[%s2 + $0x78] sm:$0xff]
    %v70 = vld [vmem:[%s2 + $0x80] sm:$0xff]
    %v71 = vld [vmem:[%s2 + $0x88] sm:$0xff]
    %v72 = vld [vmem:[%s2 + $0x90] sm:$0xff]
    %v73 = vld [vmem:[%s2 + $0x98] sm:$0xff]
    %v74 = vld [vmem:[%s2 + $0xa0] sm:$0xff]
    %v75 = vld [vmem:[%s2 + $0xa8] sm:$0xff]
    %v76 = vld [vmem:[%s2 + $0xb0] sm:$0xff]
    %v77 = vld [vmem:[%s2 + $0xb8] sm:$0xff]
    %v78 = vld [vmem:[%s2 + $0xc0] sm:$0xff]
    %v79 = vld [vmem:[%s2 + $0xc8] sm:$0xff]
    %v80 = vld [vmem:[%s2 + $0xd0] sm:$0xff]
    %v81 = vld [vmem:[%s2 + $0xd8] sm:$0xff]
    %v82 = vld [vmem:[%s2 + $0xe0] sm:$0xff]
    %v83 = vld [vmem:[%s2 + $0xe8] sm:$0xff]
    %v84 = vld [vmem:[%s2 + $0xf0] sm:$0xff]
    %v85 = vld [vmem:[%s2 + $0xf8] sm:$0xff]
    %v86 = vld [vmem:[%s2 + $0x100] sm:$0xff]
    %v87 = vld [vmem:[%s2 + $0x108] sm:$0xff]
    %v88 = vld [vmem:[%s2 + $0x110] sm:$0xff]
    %v89 = vld [vmem:[%s2 + $0x118] sm:$0xff]
    %v90 = vld [vmem:[%s2 + $0x120] sm:$0xff]
    %v91 = vld [vmem:[%s2 + $0x128] sm:$0xff]
    %v92 = vld [vmem:[%s2 + $0x130] sm:$0xff]
    %v93 = vld [vmem:[%s2 + $0x138] sm:$0xff]
    %v94 = vld [vmem:[%s2 + $0x140] sm:$0xff]
    %v95 = vld [vmem:[%s2 + $0x148] sm:$0xff]
    %v96 = vld [vmem:[%s2 + $0x150] sm:$0xff]
    %v97 = vld [vmem:[%s2 + $0x158] sm:$0xff]
    %v98 = vld [vmem:[%s2 + $0x160] sm:$0xff]
    %v99 = vld [vmem:[%s2 + $0x168] sm:$0xff]
    %v100 = vld [vmem:[%s2 + $0x170] sm:$0xff]
    %v101 = vld [vmem:[%s2 + $0x178] sm:$0xff]
    %v102 = vld [vmem:[%s2 + $0x180] sm:$0xff]
    %v103 = vld [vmem:[%s2 + $0x188] sm:$0xff]
    %v104 = vld [vmem:[%s2 + $0x190] sm:$0xff]
    %v105 = vld [vmem:[%s2 + $0x198] sm:$0xff]
    %v106 = vld [vmem:[%s2 + $0x1a0] sm:$0xff]
    %v107 = vld [vmem:[%s2 + $0x1a8] sm:$0xff]
    %v108 = vld [vmem:[%s2 + $0x1b0] sm:$0xff]
    %v109 = vld [vmem:[%s2 + $0x1b8] sm:$0xff]
    %v110 = vld [vmem:[%s2 + $0x1c0] sm:$0xff]
    %v111 = vld [vmem:[%s2 + $0x1c8] sm:$0xff]
    %v112 = vld [vmem:[%s2 + $0x1d0] sm:$0xff]
    %v113 = vld [vmem:[%s2 + $0x1d8] sm:$0xff]
    %v114 = vld [vmem:[%s2 + $0x1e0] sm:$0xff]
    %v115 = vld [vmem:[%s2 + $0x1e8] sm:$0xff]
    %v116 = vld [vmem:[%s2 + $0x1f0] sm:$0xff]
    %v117 = vld [vmem:[%s2 + $0x1f8] sm:$0xff]
    %v118 = vld [vmem:[%s2 + $0x200] sm:$0xff]
    %v119 = vld [vmem:[%s2 + $0x208] sm:$0xff]
    %v120 = vld [vmem:[%s2 + $0x210] sm:$0xff]
    %v121 = vld [vmem:[%s2 + $0x218] sm:$0xff]
    %v122 = vld [vmem:[%s2 + $0x220] sm:$0xff]
    %v123 = vld [vmem:[%s2 + $0x228] sm:$0xff]
    %v124 = vld [vmem:[%s2 + $0x230] sm:$0xff]
    %v125 = vld [vmem:[%s2 + $0x238] sm:$0xff]
    %v126 = vld [vmem:[%s2 + $0x240] sm:$0xff]
    %v127 = vld [vmem:[%s2 + $0x248] sm:$0xff]
    %v128 = vld [vmem:[%s2 + $0x250] sm:$0xff]
    %v129 = vld [vmem:[%s2 + $0x258] sm:$0xff]
    %v130 = vld [vmem:[%s2 + $0x260] sm:$0xff]
    %v131 = vld [vmem:[%s2 + $0x268] sm:$0xff]
    %v132 = vld [vmem:[%s2 + $0x270] sm:$0xff]
    %v133 = vld [vmem:[%s2 + $0x278] sm:$0xff]
    %v134 = vld [vmem:[%s2 + $0x280] sm:$0xff]
    %v135 = vld [vmem:[%s2 + $0x288] sm:$0xff]
    %v136 = vld [vmem:[%s2 + $0x290] sm:$0xff]
    %v137 = vld [vmem:[%s2 + $0x298] sm:$0xff]
    %v138 = vld [vmem:[%s2 + $0x2a0] sm:$0xff]
    %v139 = vld [vmem:[%s2 + $0x2a8] sm:$0xff]
    %v140 = vld [vmem:[%s2 + $0x2b0] sm:$0xff]
    %v141 = vld [vmem:[%s2 + $0x2b8] sm:$0xff]
    %v142 = vld [vmem:[%s2 + $0x2c0] sm:$0xff]
    %v143 = vld [vmem:[%s2 + $0x2c8] sm:$0xff]
    %v144 = vld [vmem:[%s2 + $0x2d0] sm:$0xff]
    %v145 = vld [vmem:[%s2 + $0x2d8] sm:$0xff]
    %v146 = vld [vmem:[%s2 + $0x2e0] sm:$0xff]
    %v147 = vld [vmem:[%s2 + $0x2e8] sm:$0xff]
    %v148 = vld [vmem:[%s2 + $0x2f0] sm:$0xff]
    %v149 = vld [vmem:[%s2 + $0x2f8] sm:$0xff]
    %v150 = vld [vmem:[%s2 + $0x300] sm:$0xff]
    %v151 = vld [vmem:[%s2 + $0x308] sm:$0xff]
    %v152 = vld [vmem:[%s2 + $0x310] sm:$0xff]
    %v153 = vld [vmem:[%s2 + $0x318] sm:$0xff]
    %v154 = vld [vmem:[%s2 + $0x320] sm:$0xff]
    %v155 = vld [vmem:[%s2 + $0x328] sm:$0xff]
    %v156 = vld [vmem:[%s2 + $0x330] sm:$0xff]
    %v157 = vld [vmem:[%s2 + $0x338] sm:$0xff]
    %v158 = vld [vmem:[%s2 + $0x340] sm:$0xff]
    %v159 = vld [vmem:[%s2 + $0x348] sm:$0xff]
    %v160 = vld [vmem:[%s2 + $0x350] sm:$0xff]
    %v161 = vld [vmem:[%s2 + $0x358] sm:$0xff]
    %v162 = vld [vmem:[%s2 + $0x360] sm:$0xff]
    %v163 = vld [vmem:[%s2 + $0x368] sm:$0xff]
    %v164 = vld [vmem:[%s2 + $0x370] sm:$0xff]
    %v165 = vld [vmem:[%s2 + $0x378] sm:$0xff]
    %v166 = vld [vmem:[%s2 + $0x380] sm:$0xff]
    %v167 = vld [vmem:[%s2 + $0x388] sm:$0xff]
    %v168 = vld [vmem:[%s2 + $0x390] sm:$0xff]
    %v169 = vld [vmem:[%s2 + $0x398] sm:$0xff]
    %v170 = vld [vmem:[%s2 + $0x3a0] sm:$0xff]
    %v171 = vld [vmem:[%s2 + $0x3a8] sm:$0xff]
    %v172 = vld [vmem:[%s2 + $0x3b0] sm:$0xff]
    %v173 = vld [vmem:[%s2 + $0x3b8] sm:$0xff]
    %v174 = vld [vmem:[%s2 + $0x3c0] sm:$0xff]
    %v175 = vld [vmem:[%s2 + $0x3c8] sm:$0xff]
    %v176 = vld [vmem:[%s2 + $0x3d0] sm:$0xff]
    %v177 = vld [vmem:[%s2 + $0x3d8] sm:$0xff]
    %v178 = vld [vmem:[%s2 + $0x3e0] sm:$0xff]
    %v179 = vld [vmem:[%s2 + $0x3e8] sm:$0xff]
    %v180 = vld [vmem:[%s2 + $0x3f0] sm:$0xff]
    %v181 = vld [vmem:[%s2 + $0x3f8] sm:$0xff]
    %v182 = vld [vmem:[%s2 + $0x400] sm:$0xff]
    %v183 = vld [vmem:[%s2 + $0x408] sm:$0xff]
    %v184 = vld [vmem:[%s2 + $0x410] sm:$0xff]
    %v185 = vld [vmem:[%s2 + $0x418] sm:$0xff]
    %v186 = vld [vmem:[%s2 + $0x420] sm:$0xff]
    %v187 = vld [vmem:[%s2 + $0x428] sm:$0xff]
    %v188 = vld [vmem:[%s2 + $0x430] sm:$0xff]
    %v189 = vld [vmem:[%s2 + $0x438] sm:$0xff]
    %v190 = vld [vmem:[%s2 + $0x440] sm:$0xff]
    %v191 = vld [vmem:[%s2 + $0x448] sm:$0xff]
    %v192 = vld [vmem:[%s2 + $0x450] sm:$0xff]
    %v193 = vld [vmem:[%s2 + $0x458] sm:$0xff]
    %v194 = vld [vmem:[%s2 + $0x460] sm:$0xff]
    %v195 = vld [vmem:[%s2 + $0x468] sm:$0xff]
    %v196 = vld [vmem:[%s2 + $0x470] sm:$0xff]
    %v197 = vld [vmem:[%s2 + $0x478] sm:$0xff]
    %v198 = vld [vmem:[%s2 + $0x480] sm:$0xff]
    %v199 = vld [vmem:[%s2 + $0x488] sm:$0xff]
    %v200 = vld [vmem:[%s2 + $0x490] sm:$0xff]
    %v201 = vld [vmem:[%s2 + $0x498] sm:$0xff]
    %v202 = vld [vmem:[%s2 + $0x4a0] sm:$0xff]
    %v203 = vld [vmem:[%s2 + $0x4a8] sm:$0xff]
    %v204 = vld [vmem:[%s2 + $0x4b0] sm:$0xff]
    %v205 = vld [vmem:[%s2 + $0x4b8] sm:$0xff]
    %v206 = vld [vmem:[%s2 + $0x4c0] sm:$0xff]
    %v207 = vld [vmem:[%s2 + $0x4c8] sm:$0xff]
    %v208 = vld [vmem:[%s2 + $0x4d0] sm:$0xff]
    %v209 = vld [vmem:[%s2 + $0x4d8] sm:$0xff]
    %v210 = vld [vmem:[%s2 + $0x4e0] sm:$0xff]
    %v211 = vld [vmem:[%s2 + $0x4e8] sm:$0xff]
    %v212 = vld [vmem:[%s2 + $0x4f0] sm:$0xff]
    %v213 = vld [vmem:[%s2 + $0x4f8] sm:$0xff]
    %v214 = vld [vmem:[%s2 + $0x500] sm:$0xff]
    %v215 = vld [vmem:[%s2 + $0x508] sm:$0xff]
    %v216 = vld [vmem:[%s2 + $0x510] sm:$0xff]
    %v217 = vld [vmem:[%s2 + $0x518] sm:$0xff]
    %v218 = vld [vmem:[%s2 + $0x520] sm:$0xff]
    %v219 = vld [vmem:[%s2 + $0x528] sm:$0xff]
    %v220 = vld [vmem:[%s2 + $0x530] sm:$0xff]
    %v221 = vld [vmem:[%s2 + $0x538] sm:$0xff]
    %v222 = vld [vmem:[%s2 + $0x540] sm:$0xff]
    %v223 = vld [vmem:[%s2 + $0x548] sm:$0xff]
    %v224 = vld [vmem:[%s2 + $0x550] sm:$0xff]
    %v225 = vld [vmem:[%s2 + $0x558] sm:$0xff]
    %v226 = vld [vmem:[%s2 + $0x560] sm:$0xff]
    %v227 = vld [vmem:[%s2 + $0x568] sm:$0xff]
    %v228 = vld [vmem:[%s2 + $0x570] sm:$0xff]
    %v229 = vld [vmem:[%s2 + $0x578] sm:$0xff]
    %v230 = vld [vmem:[%s2 + $0x580] sm:$0xff]
    %v231 = vld [vmem:[%s2 + $0x588] sm:$0xff]
    %v232 = vld [vmem:[%s2 + $0x590] sm:$0xff]
    %v233 = vld [vmem:[%s2 + $0x598] sm:$0xff]
    %v234 = vld [vmem:[%s2 + $0x5a0] sm:$0xff]
    %v235 = vld [vmem:[%s2 + $0x5a8] sm:$0xff]
    %v236 = vld [vmem:[%s2 + $0x5b0] sm:$0xff]
    %v237 = vld [vmem:[%s2 + $0x5b8] sm:$0xff]
    %v238 = vld [vmem:[%s2 + $0x5c0] sm:$0xff]
    %v239 = vld [vmem:[%s2 + $0x5c8] sm:$0xff]
    %v240 = vld [vmem:[%s2 + $0x5d0] sm:$0xff]
    %v241 = vld [vmem:[%s2 + $0x5d8] sm:$0xff]
    %v242 = vld [vmem:[%s2 + $0x5e0] sm:$0xff]
    %v243 = vld [vmem:[%s2 + $0x5e8] sm:$0xff]
    %v244 = vld [vmem:[%s2 + $0x5f0] sm:$0xff]
    %v245 = vld [vmem:[%s2 + $0x5f8] sm:$0xff]
    %v246 = vld [vmem:[%s2 + $0x600] sm:$0xff]
    %v247 = vld [vmem:[%s2 + $0x608] sm:$0xff]
    %v248 = vld [vmem:[%s2 + $0x610] sm:$0xff]
    %v249 = vld [vmem:[%s2 + $0x618] sm:$0xff]
    %v250 = vld [vmem:[%s3] sm:$0xf]
    %v252 = vlaneseq
    %v253 = vshrl.u32 %v252, 7
    %v254 = vsub.s32 0, %v253
    %v255 = vrot.slane %v250, %v254
    %v256 = vlaneseq
    %v257 = vshrl.u32 %v256, 7
    %v258 = vsub.s32 1, %v257
    %v259 = vrot.slane %v250, %v258
    %v260 = vlaneseq
    %v261 = vshrl.u32 %v260, 7
    %v262 = vsub.s32 2, %v261
    %v263 = vrot.slane %v250, %v262
    %v264 = vlaneseq
    %v265 = vshrl.u32 %v264, 7
    %v266 = vsub.s32 3, %v265
    %v267 = vrot.slane %v250, %v266
    %v468 = vunpack.c.l.b16 %v54
    %v469 = vunpack.c.h.b16 %v54
    %v470 = vunpack.c.l.b16 %v55
    %v471 = vunpack.c.h.b16 %v55
    %v472 = vunpack.c.l.b16 %v56
    %v473 = vunpack.c.h.b16 %v56
    %v474 = vunpack.c.l.b16 %v57
    %v475 = vunpack.c.h.b16 %v57
    %v476 = vunpack.c.l.b16 %v58
    %v477 = vunpack.c.h.b16 %v58
    %v478 = vunpack.c.l.b16 %v59
    %v479 = vunpack.c.h.b16 %v59
    %v480 = vunpack.c.l.b16 %v60
    %v481 = vunpack.c.h.b16 %v60
    %v482 = vunpack.c.l.b16 %v61
    %v483 = vunpack.c.h.b16 %v61
    %v484 = vunpack.c.l.b16 %v62
    %v485 = vunpack.c.h.b16 %v62
    %v486 = vunpack.c.l.b16 %v63
    %v487 = vunpack.c.h.b16 %v63
    %v488 = vunpack.c.l.b16 %v64
    %v489 = vunpack.c.h.b16 %v64
    %v490 = vunpack.c.l.b16 %v65
    %v491 = vunpack.c.h.b16 %v65
    %v492 = vunpack.c.l.b16 %v66
    %v493 = vunpack.c.h.b16 %v66
    %v494 = vunpack.c.l.b16 %v67
    %v495 = vunpack.c.h.b16 %v67
    %v496 = vunpack.c.l.b16 %v68
    %v497 = vunpack.c.h.b16 %v68
    %v498 = vunpack.c.l.b16 %v69
    %v499 = vunpack.c.h.b16 %v69
    %v500 = vunpack.c.l.b16 %v70
    %v501 = vunpack.c.h.b16 %v70
    %v502 = vunpack.c.l.b16 %v71
    %v503 = vunpack.c.h.b16 %v71
    %v504 = vunpack.c.l.b16 %v72
    %v505 = vunpack.c.h.b16 %v72
    %v506 = vunpack.c.l.b16 %v73
    %v507 = vunpack.c.h.b16 %v73
    %v508 = vunpack.c.l.b16 %v74
    %v509 = vunpack.c.h.b16 %v74
    %v510 = vunpack.c.l.b16 %v75
    %v511 = vunpack.c.h.b16 %v75
    %v512 = vunpack.c.l.b16 %v76
    %v513 = vunpack.c.h.b16 %v76
    %v514 = vunpack.c.l.b16 %v77
    %v515 = vunpack.c.h.b16 %v77
    %v516 = vunpack.c.l.b16 %v78
    %v517 = vunpack.c.h.b16 %v78
    %v518 = vunpack.c.l.b16 %v79
    %v519 = vunpack.c.h.b16 %v79
    %v520 = vunpack.c.l.b16 %v80
    %v521 = vunpack.c.h.b16 %v80
    %v522 = vunpack.c.l.b16 %v81
    %v523 = vunpack.c.h.b16 %v81
    %v524 = vunpack.c.l.b16 %v82
    %v525 = vunpack.c.h.b16 %v82
    %v526 = vunpack.c.l.b16 %v83
    %v527 = vunpack.c.h.b16 %v83
    %v528 = vunpack.c.l.b16 %v84
    %v529 = vunpack.c.h.b16 %v84
    %v530 = vunpack.c.l.b16 %v85
    %v531 = vunpack.c.h.b16 %v85
    %v532 = vunpack.c.l.b16 %v86
    %v533 = vunpack.c.h.b16 %v86
    %v534 = vunpack.c.l.b16 %v87
    %v535 = vunpack.c.h.b16 %v87
    %v536 = vunpack.c.l.b16 %v88
    %v537 = vunpack.c.h.b16 %v88
    %v538 = vunpack.c.l.b16 %v89
    %v539 = vunpack.c.h.b16 %v89
    %v540 = vunpack.c.l.b16 %v90
    %v541 = vunpack.c.h.b16 %v90
    %v542 = vunpack.c.l.b16 %v91
    %v543 = vunpack.c.h.b16 %v91
    %v544 = vunpack.c.l.b16 %v92
    %v545 = vunpack.c.h.b16 %v92
    %v546 = vunpack.c.l.b16 %v93
    %v547 = vunpack.c.h.b16 %v93
    %v548 = vunpack.c.l.b16 %v94
    %v549 = vunpack.c.h.b16 %v94
    %v550 = vunpack.c.l.b16 %v95
    %v551 = vunpack.c.h.b16 %v95
    %v552 = vunpack.c.l.b16 %v96
    %v553 = vunpack.c.h.b16 %v96
    %v554 = vunpack.c.l.b16 %v97
    %v555 = vunpack.c.h.b16 %v97
    %v556 = vunpack.c.l.b16 %v98
    %v557 = vunpack.c.h.b16 %v98
    %v558 = vunpack.c.l.b16 %v99
    %v559 = vunpack.c.h.b16 %v99
    %v560 = vunpack.c.l.b16 %v100
    %v561 = vunpack.c.h.b16 %v100
    %v562 = vunpack.c.l.b16 %v101
    %v563 = vunpack.c.h.b16 %v101
    %v564 = vunpack.c.l.b16 %v102
    %v565 = vunpack.c.h.b16 %v102
    %v566 = vunpack.c.l.b16 %v103
    %v567 = vunpack.c.h.b16 %v103
    %v568 = vunpack.c.l.b16 %v104
    %v569 = vunpack.c.h.b16 %v104
    %v570 = vunpack.c.l.b16 %v105
    %v571 = vunpack.c.h.b16 %v105
    %v572 = vunpack.c.l.b16 %v106
    %v573 = vunpack.c.h.b16 %v106
    %v574 = vunpack.c.l.b16 %v107
    %v575 = vunpack.c.h.b16 %v107
    %v576 = vunpack.c.l.b16 %v108
    %v577 = vunpack.c.h.b16 %v108
    %v578 = vunpack.c.l.b16 %v109
    %v579 = vunpack.c.h.b16 %v109
    %v580 = vunpack.c.l.b16 %v110
    %v581 = vunpack.c.h.b16 %v110
    %v582 = vunpack.c.l.b16 %v111
    %v583 = vunpack.c.h.b16 %v111
    %v584 = vunpack.c.l.b16 %v112
    %v585 = vunpack.c.h.b16 %v112
    %v586 = vunpack.c.l.b16 %v113
    %v587 = vunpack.c.h.b16 %v113
    %v588 = vunpack.c.l.b16 %v114
    %v589 = vunpack.c.h.b16 %v114
    %v590 = vunpack.c.l.b16 %v115
    %v591 = vunpack.c.h.b16 %v115
    %v592 = vunpack.c.l.b16 %v116
    %v593 = vunpack.c.h.b16 %v116
    %v594 = vunpack.c.l.b16 %v117
    %v595 = vunpack.c.h.b16 %v117
    %v596 = vunpack.c.l.b16 %v118
    %v597 = vunpack.c.h.b16 %v118
    %v598 = vunpack.c.l.b16 %v119
    %v599 = vunpack.c.h.b16 %v119
    %v600 = vunpack.c.l.b16 %v120
    %v601 = vunpack.c.h.b16 %v120
    %v602 = vunpack.c.l.b16 %v121
    %v603 = vunpack.c.h.b16 %v121
    %v604 = vunpack.c.l.b16 %v122
    %v605 = vunpack.c.h.b16 %v122
    %v606 = vunpack.c.l.b16 %v123
    %v607 = vunpack.c.h.b16 %v123
    %v608 = vunpack.c.l.b16 %v124
    %v609 = vunpack.c.h.b16 %v124
    %v610 = vunpack.c.l.b16 %v125
    %v611 = vunpack.c.h.b16 %v125
    %v612 = vunpack.c.l.b16 %v126
    %v613 = vunpack.c.h.b16 %v126
    %v614 = vunpack.c.l.b16 %v127
    %v615 = vunpack.c.h.b16 %v127
    %v616 = vunpack.c.l.b16 %v128
    %v617 = vunpack.c.h.b16 %v128
    %v618 = vunpack.c.l.b16 %v129
    %v619 = vunpack.c.h.b16 %v129
    %v620 = vunpack.c.l.b16 %v130
    %v621 = vunpack.c.h.b16 %v130
    %v622 = vunpack.c.l.b16 %v131
    %v623 = vunpack.c.h.b16 %v131
    %v624 = vunpack.c.l.b16 %v132
    %v625 = vunpack.c.h.b16 %v132
    %v626 = vunpack.c.l.b16 %v133
    %v627 = vunpack.c.h.b16 %v133
    %v628 = vunpack.c.l.b16 %v134
    %v629 = vunpack.c.h.b16 %v134
    %v630 = vunpack.c.l.b16 %v135
    %v631 = vunpack.c.h.b16 %v135
    %v632 = vunpack.c.l.b16 %v136
    %v633 = vunpack.c.h.b16 %v136
    %v634 = vunpack.c.l.b16 %v137
    %v635 = vunpack.c.h.b16 %v137
    %v636 = vunpack.c.l.b16 %v138
    %v637 = vunpack.c.h.b16 %v138
    %v638 = vunpack.c.l.b16 %v139
    %v639 = vunpack.c.h.b16 %v139
    %v640 = vunpack.c.l.b16 %v140
    %v641 = vunpack.c.h.b16 %v140
    %v642 = vunpack.c.l.b16 %v141
    %v643 = vunpack.c.h.b16 %v141
    %v644 = vunpack.c.l.b16 %v142
    %v645 = vunpack.c.h.b16 %v142
    %v646 = vunpack.c.l.b16 %v143
    %v647 = vunpack.c.h.b16 %v143
    %v648 = vunpack.c.l.b16 %v144
    %v649 = vunpack.c.h.b16 %v144
    %v650 = vunpack.c.l.b16 %v145
    %v651 = vunpack.c.h.b16 %v145
    %v652 = vunpack.c.l.b16 %v146
    %v653 = vunpack.c.h.b16 %v146
    %v654 = vunpack.c.l.b16 %v147
    %v655 = vunpack.c.h.b16 %v147
    %v656 = vunpack.c.l.b16 %v148
    %v657 = vunpack.c.h.b16 %v148
    %v658 = vunpack.c.l.b16 %v149
    %v659 = vunpack.c.h.b16 %v149
    %v660 = vunpack.c.l.b16 %v150
    %v661 = vunpack.c.h.b16 %v150
    %v662 = vunpack.c.l.b16 %v151
    %v663 = vunpack.c.h.b16 %v151
    %v664 = vunpack.c.l.b16 %v152
    %v665 = vunpack.c.h.b16 %v152
    %v666 = vunpack.c.l.b16 %v153
    %v667 = vunpack.c.h.b16 %v153
    %v668 = vunpack.c.l.b16 %v154
    %v669 = vunpack.c.h.b16 %v154
    %v670 = vunpack.c.l.b16 %v155
    %v671 = vunpack.c.h.b16 %v155
    %v672 = vunpack.c.l.b16 %v156
    %v673 = vunpack.c.h.b16 %v156
    %v674 = vunpack.c.l.b16 %v157
    %v675 = vunpack.c.h.b16 %v157
    %v676 = vunpack.c.l.b16 %v158
    %v677 = vunpack.c.h.b16 %v158
    %v678 = vunpack.c.l.b16 %v159
    %v679 = vunpack.c.h.b16 %v159
    %v680 = vunpack.c.l.b16 %v160
    %v681 = vunpack.c.h.b16 %v160
    %v682 = vunpack.c.l.b16 %v161
    %v683 = vunpack.c.h.b16 %v161
    %v684 = vunpack.c.l.b16 %v162
    %v685 = vunpack.c.h.b16 %v162
    %v686 = vunpack.c.l.b16 %v163
    %v687 = vunpack.c.h.b16 %v163
    %v688 = vunpack.c.l.b16 %v164
    %v689 = vunpack.c.h.b16 %v164
    %v690 = vunpack.c.l.b16 %v165
    %v691 = vunpack.c.h.b16 %v165
    %v692 = vunpack.c.l.b16 %v166
    %v693 = vunpack.c.h.b16 %v166
    %v694 = vunpack.c.l.b16 %v167
    %v695 = vunpack.c.h.b16 %v167
    %v696 = vunpack.c.l.b16 %v168
    %v697 = vunpack.c.h.b16 %v168
    %v698 = vunpack.c.l.b16 %v169
    %v699 = vunpack.c.h.b16 %v169
    %v700 = vunpack.c.l.b16 %v170
    %v701 = vunpack.c.h.b16 %v170
    %v702 = vunpack.c.l.b16 %v171
    %v703 = vunpack.c.h.b16 %v171
    %v704 = vunpack.c.l.b16 %v172
    %v705 = vunpack.c.h.b16 %v172
    %v706 = vunpack.c.l.b16 %v173
    %v707 = vunpack.c.h.b16 %v173
    %v708 = vunpack.c.l.b16 %v174
    %v709 = vunpack.c.h.b16 %v174
    %v710 = vunpack.c.l.b16 %v175
    %v711 = vunpack.c.h.b16 %v175
    %v712 = vunpack.c.l.b16 %v176
    %v713 = vunpack.c.h.b16 %v176
    %v714 = vunpack.c.l.b16 %v177
    %v715 = vunpack.c.h.b16 %v177
    %v716 = vunpack.c.l.b16 %v178
    %v717 = vunpack.c.h.b16 %v178
    %v718 = vunpack.c.l.b16 %v179
    %v719 = vunpack.c.h.b16 %v179
    %v720 = vunpack.c.l.b16 %v180
    %v721 = vunpack.c.h.b16 %v180
    %v722 = vunpack.c.l.b16 %v181
    %v723 = vunpack.c.h.b16 %v181
    %v724 = vunpack.c.l.b16 %v182
    %v725 = vunpack.c.h.b16 %v182
    %v726 = vunpack.c.l.b16 %v183
    %v727 = vunpack.c.h.b16 %v183
    %v728 = vunpack.c.l.b16 %v184
    %v729 = vunpack.c.h.b16 %v184
    %v730 = vunpack.c.l.b16 %v185
    %v731 = vunpack.c.h.b16 %v185
    %v732 = vunpack.c.l.b16 %v186
    %v733 = vunpack.c.h.b16 %v186
    %v734 = vunpack.c.l.b16 %v187
    %v735 = vunpack.c.h.b16 %v187
    %v736 = vunpack.c.l.b16 %v188
    %v737 = vunpack.c.h.b16 %v188
    %v738 = vunpack.c.l.b16 %v189
    %v739 = vunpack.c.h.b16 %v189
    %v740 = vunpack.c.l.b16 %v190
    %v741 = vunpack.c.h.b16 %v190
    %v742 = vunpack.c.l.b16 %v191
    %v743 = vunpack.c.h.b16 %v191
    %v744 = vunpack.c.l.b16 %v192
    %v745 = vunpack.c.h.b16 %v192
    %v746 = vunpack.c.l.b16 %v193
    %v747 = vunpack.c.h.b16 %v193
    %v748 = vunpack.c.l.b16 %v194
    %v749 = vunpack.c.h.b16 %v194
    %v750 = vunpack.c.l.b16 %v195
    %v751 = vunpack.c.h.b16 %v195
    %v752 = vunpack.c.l.b16 %v196
    %v753 = vunpack.c.h.b16 %v196
    %v754 = vunpack.c.l.b16 %v197
    %v755 = vunpack.c.h.b16 %v197
    %v756 = vunpack.c.l.b16 %v198
    %v757 = vunpack.c.h.b16 %v198
    %v758 = vunpack.c.l.b16 %v199
    %v759 = vunpack.c.h.b16 %v199
    %v760 = vunpack.c.l.b16 %v200
    %v761 = vunpack.c.h.b16 %v200
    %v762 = vunpack.c.l.b16 %v201
    %v763 = vunpack.c.h.b16 %v201
    %v764 = vunpack.c.l.b16 %v202
    %v765 = vunpack.c.h.b16 %v202
    %v766 = vunpack.c.l.b16 %v203
    %v767 = vunpack.c.h.b16 %v203
    %v768 = vunpack.c.l.b16 %v204
    %v769 = vunpack.c.h.b16 %v204
    %v770 = vunpack.c.l.b16 %v205
    %v771 = vunpack.c.h.b16 %v205
    %v772 = vunpack.c.l.b16 %v206
    %v773 = vunpack.c.h.b16 %v206
    %v774 = vunpack.c.l.b16 %v207
    %v775 = vunpack.c.h.b16 %v207
    %v776 = vunpack.c.l.b16 %v208
    %v777 = vunpack.c.h.b16 %v208
    %v778 = vunpack.c.l.b16 %v209
    %v779 = vunpack.c.h.b16 %v209
    %v780 = vunpack.c.l.b16 %v210
    %v781 = vunpack.c.h.b16 %v210
    %v782 = vunpack.c.l.b16 %v211
    %v783 = vunpack.c.h.b16 %v211
    %v784 = vunpack.c.l.b16 %v212
    %v785 = vunpack.c.h.b16 %v212
    %v786 = vunpack.c.l.b16 %v213
    %v787 = vunpack.c.h.b16 %v213
    %v788 = vunpack.c.l.b16 %v214
    %v789 = vunpack.c.h.b16 %v214
    %v790 = vunpack.c.l.b16 %v215
    %v791 = vunpack.c.h.b16 %v215
    %v792 = vunpack.c.l.b16 %v216
    %v793 = vunpack.c.h.b16 %v216
    %v794 = vunpack.c.l.b16 %v217
    %v795 = vunpack.c.h.b16 %v217
    %v796 = vunpack.c.l.b16 %v218
    %v797 = vunpack.c.h.b16 %v218
    %v798 = vunpack.c.l.b16 %v219
    %v799 = vunpack.c.h.b16 %v219
    %v800 = vunpack.c.l.b16 %v220
    %v801 = vunpack.c.h.b16 %v220
    %v802 = vunpack.c.l.b16 %v221
    %v803 = vunpack.c.h.b16 %v221
    %v804 = vunpack.c.l.b16 %v222
    %v805 = vunpack.c.h.b16 %v222
    %v806 = vunpack.c.l.b16 %v223
    %v807 = vunpack.c.h.b16 %v223
    %v808 = vunpack.c.l.b16 %v224
    %v809 = vunpack.c.h.b16 %v224
    %v810 = vunpack.c.l.b16 %v225
    %v811 = vunpack.c.h.b16 %v225
    %v812 = vunpack.c.l.b16 %v226
    %v813 = vunpack.c.h.b16 %v226
    %v814 = vunpack.c.l.b16 %v227
    %v815 = vunpack.c.h.b16 %v227
    %v816 = vunpack.c.l.b16 %v228
    %v817 = vunpack.c.h.b16 %v228
    %v818 = vunpack.c.l.b16 %v229
    %v819 = vunpack.c.h.b16 %v229
    %v820 = vunpack.c.l.b16 %v230
    %v821 = vunpack.c.h.b16 %v230
    %v822 = vunpack.c.l.b16 %v231
    %v823 = vunpack.c.h.b16 %v231
    %v824 = vunpack.c.l.b16 %v232
    %v825 = vunpack.c.h.b16 %v232
    %v826 = vunpack.c.l.b16 %v233
    %v827 = vunpack.c.h.b16 %v233
    %v828 = vunpack.c.l.b16 %v234
    %v829 = vunpack.c.h.b16 %v234
    %v830 = vunpack.c.l.b16 %v235
    %v831 = vunpack.c.h.b16 %v235
    %v832 = vunpack.c.l.b16 %v236
    %v833 = vunpack.c.h.b16 %v236
    %v834 = vunpack.c.l.b16 %v237
    %v835 = vunpack.c.h.b16 %v237
    %v836 = vunpack.c.l.b16 %v238
    %v837 = vunpack.c.h.b16 %v238
    %v838 = vunpack.c.l.b16 %v239
    %v839 = vunpack.c.h.b16 %v239
    %v840 = vunpack.c.l.b16 %v240
    %v841 = vunpack.c.h.b16 %v240
    %v842 = vunpack.c.l.b16 %v241
    %v843 = vunpack.c.h.b16 %v241
    %v844 = vunpack.c.l.b16 %v242
    %v845 = vunpack.c.h.b16 %v242
    %v846 = vunpack.c.l.b16 %v243
    %v847 = vunpack.c.h.b16 %v243
    %v848 = vunpack.c.l.b16 %v244
    %v849 = vunpack.c.h.b16 %v244
    %v850 = vunpack.c.l.b16 %v245
    %v851 = vunpack.c.h.b16 %v245
    %v852 = vunpack.c.l.b16 %v246
    %v853 = vunpack.c.h.b16 %v246
    %v854 = vunpack.c.l.b16 %v247
    %v855 = vunpack.c.h.b16 %v247
    %v856 = vunpack.c.l.b16 %v248
    %v857 = vunpack.c.h.b16 %v248
    %v858 = vunpack.c.l.b16 %v249
    %v859 = vunpack.c.h.b16 %v249
    %v860 = vpack.c.b16 %v472, %v468
    %v861 = vpack.c.b16 %v473, %v469
    %v862 = vpack.c.b16 %v474, %v470
    %v863 = vpack.c.b16 %v475, %v471
    %v864 = vpack.c.b16 %v480, %v476
    %v865 = vpack.c.b16 %v481, %v477
    %v866 = vpack.c.b16 %v482, %v478
    %v867 = vpack.c.b16 %v483, %v479
    %v868 = vpack.c.b16 %v488, %v484
    %v869 = vpack.c.b16 %v489, %v485
    %v870 = vpack.c.b16 %v490, %v486
    %v871 = vpack.c.b16 %v491, %v487
    %v872 = vpack.c.b16 %v496, %v492
    %v873 = vpack.c.b16 %v497, %v493
    %v874 = vpack.c.b16 %v498, %v494
    %v875 = vpack.c.b16 %v499, %v495
    %v876 = vpack.c.b16 %v504, %v500
    %v877 = vpack.c.b16 %v505, %v501
    %v878 = vpack.c.b16 %v506, %v502
    %v879 = vpack.c.b16 %v507, %v503
    %v880 = vpack.c.b16 %v512, %v508
    %v881 = vpack.c.b16 %v513, %v509
    %v882 = vpack.c.b16 %v514, %v510
    %v883 = vpack.c.b16 %v515, %v511
    %v884 = vpack.c.b16 %v520, %v516
    %v885 = vpack.c.b16 %v521, %v517
    %v886 = vpack.c.b16 %v522, %v518
    %v887 = vpack.c.b16 %v523, %v519
    %v888 = vpack.c.b16 %v528, %v524
    %v889 = vpack.c.b16 %v529, %v525
    %v890 = vpack.c.b16 %v530, %v526
    %v891 = vpack.c.b16 %v531, %v527
    %v892 = vpack.c.b16 %v536, %v532
    %v893 = vpack.c.b16 %v537, %v533
    %v894 = vpack.c.b16 %v538, %v534
    %v895 = vpack.c.b16 %v539, %v535
    %v896 = vpack.c.b16 %v544, %v540
    %v897 = vpack.c.b16 %v545, %v541
    %v898 = vpack.c.b16 %v546, %v542
    %v899 = vpack.c.b16 %v547, %v543
    %v900 = vpack.c.b16 %v552, %v548
    %v901 = vpack.c.b16 %v553, %v549
    %v902 = vpack.c.b16 %v554, %v550
    %v903 = vpack.c.b16 %v555, %v551
    %v904 = vpack.c.b16 %v560, %v556
    %v905 = vpack.c.b16 %v561, %v557
    %v906 = vpack.c.b16 %v562, %v558
    %v907 = vpack.c.b16 %v563, %v559
    %v908 = vpack.c.b16 %v568, %v564
    %v909 = vpack.c.b16 %v569, %v565
    %v910 = vpack.c.b16 %v570, %v566
    %v911 = vpack.c.b16 %v571, %v567
    %v912 = vpack.c.b16 %v576, %v572
    %v913 = vpack.c.b16 %v577, %v573
    %v914 = vpack.c.b16 %v578, %v574
    %v915 = vpack.c.b16 %v579, %v575
    %v916 = vpack.c.b16 %v584, %v580
    %v917 = vpack.c.b16 %v585, %v581
    %v918 = vpack.c.b16 %v586, %v582
    %v919 = vpack.c.b16 %v587, %v583
    %v920 = vpack.c.b16 %v592, %v588
    %v921 = vpack.c.b16 %v593, %v589
    %v922 = vpack.c.b16 %v594, %v590
    %v923 = vpack.c.b16 %v595, %v591
    %v924 = vpack.c.b16 %v600, %v596
    %v925 = vpack.c.b16 %v601, %v597
    %v926 = vpack.c.b16 %v602, %v598
    %v927 = vpack.c.b16 %v603, %v599
    %v928 = vpack.c.b16 %v608, %v604
    %v929 = vpack.c.b16 %v609, %v605
    %v930 = vpack.c.b16 %v610, %v606
    %v931 = vpack.c.b16 %v611, %v607
    %v932 = vpack.c.b16 %v616, %v612
    %v933 = vpack.c.b16 %v617, %v613
    %v934 = vpack.c.b16 %v618, %v614
    %v935 = vpack.c.b16 %v619, %v615
    %v936 = vpack.c.b16 %v624, %v620
    %v937 = vpack.c.b16 %v625, %v621
    %v938 = vpack.c.b16 %v626, %v622
    %v939 = vpack.c.b16 %v627, %v623
    %v940 = vpack.c.b16 %v632, %v628
    %v941 = vpack.c.b16 %v633, %v629
    %v942 = vpack.c.b16 %v634, %v630
    %v943 = vpack.c.b16 %v635, %v631
    %v944 = vpack.c.b16 %v640, %v636
    %v945 = vpack.c.b16 %v641, %v637
    %v946 = vpack.c.b16 %v642, %v638
    %v947 = vpack.c.b16 %v643, %v639
    %v948 = vpack.c.b16 %v648, %v644
    %v949 = vpack.c.b16 %v649, %v645
    %v950 = vpack.c.b16 %v650, %v646
    %v951 = vpack.c.b16 %v651, %v647
    %v952 = vpack.c.b16 %v656, %v652
    %v953 = vpack.c.b16 %v657, %v653
    %v954 = vpack.c.b16 %v658, %v654
    %v955 = vpack.c.b16 %v659, %v655
    %v956 = vpack.c.b16 %v664, %v660
    %v957 = vpack.c.b16 %v665, %v661
    %v958 = vpack.c.b16 %v666, %v662
    %v959 = vpack.c.b16 %v667, %v663
    %v960 = vpack.c.b16 %v672, %v668
    %v961 = vpack.c.b16 %v673, %v669
    %v962 = vpack.c.b16 %v674, %v670
    %v963 = vpack.c.b16 %v675, %v671
    %v964 = vpack.c.b16 %v680, %v676
    %v965 = vpack.c.b16 %v681, %v677
    %v966 = vpack.c.b16 %v682, %v678
    %v967 = vpack.c.b16 %v683, %v679
    %v968 = vpack.c.b16 %v688, %v684
    %v969 = vpack.c.b16 %v689, %v685
    %v970 = vpack.c.b16 %v690, %v686
    %v971 = vpack.c.b16 %v691, %v687
    %v972 = vpack.c.b16 %v696, %v692
    %v973 = vpack.c.b16 %v697, %v693
    %v974 = vpack.c.b16 %v698, %v694
    %v975 = vpack.c.b16 %v699, %v695
    %v976 = vpack.c.b16 %v704, %v700
    %v977 = vpack.c.b16 %v705, %v701
    %v978 = vpack.c.b16 %v706, %v702
    %v979 = vpack.c.b16 %v707, %v703
    %v980 = vpack.c.b16 %v712, %v708
    %v981 = vpack.c.b16 %v713, %v709
    %v982 = vpack.c.b16 %v714, %v710
    %v983 = vpack.c.b16 %v715, %v711
    %v984 = vpack.c.b16 %v720, %v716
    %v985 = vpack.c.b16 %v721, %v717
    %v986 = vpack.c.b16 %v722, %v718
    %v987 = vpack.c.b16 %v723, %v719
    %v988 = vpack.c.b16 %v728, %v724
    %v989 = vpack.c.b16 %v729, %v725
    %v990 = vpack.c.b16 %v730, %v726
    %v991 = vpack.c.b16 %v731, %v727
    %v992 = vpack.c.b16 %v736, %v732
    %v993 = vpack.c.b16 %v737, %v733
    %v994 = vpack.c.b16 %v738, %v734
    %v995 = vpack.c.b16 %v739, %v735
    %v996 = vpack.c.b16 %v744, %v740
    %v997 = vpack.c.b16 %v745, %v741
    %v998 = vpack.c.b16 %v746, %v742
    %v999 = vpack.c.b16 %v747, %v743
    %v1000 = vpack.c.b16 %v752, %v748
    %v1001 = vpack.c.b16 %v753, %v749
    %v1002 = vpack.c.b16 %v754, %v750
    %v1003 = vpack.c.b16 %v755, %v751
    %v1004 = vpack.c.b16 %v760, %v756
    %v1005 = vpack.c.b16 %v761, %v757
    %v1006 = vpack.c.b16 %v762, %v758
    %v1007 = vpack.c.b16 %v763, %v759
    %v1008 = vpack.c.b16 %v768, %v764
    %v1009 = vpack.c.b16 %v769, %v765
    %v1010 = vpack.c.b16 %v770, %v766
    %v1011 = vpack.c.b16 %v771, %v767
    %v1012 = vpack.c.b16 %v776, %v772
    %v1013 = vpack.c.b16 %v777, %v773
    %v1014 = vpack.c.b16 %v778, %v774
    %v1015 = vpack.c.b16 %v779, %v775
    %v1016 = vpack.c.b16 %v784, %v780
    %v1017 = vpack.c.b16 %v785, %v781
    %v1018 = vpack.c.b16 %v786, %v782
    %v1019 = vpack.c.b16 %v787, %v783
    %v1020 = vpack.c.b16 %v792, %v788
    %v1021 = vpack.c.b16 %v793, %v789
    %v1022 = vpack.c.b16 %v794, %v790
    %v1023 = vpack.c.b16 %v795, %v791
    %v1024 = vpack.c.b16 %v800, %v796
    %v1025 = vpack.c.b16 %v801, %v797
    %v1026 = vpack.c.b16 %v802, %v798
    %v1027 = vpack.c.b16 %v803, %v799
    %v1028 = vpack.c.b16 %v808, %v804
    %v1029 = vpack.c.b16 %v809, %v805
    %v1030 = vpack.c.b16 %v810, %v806
    %v1031 = vpack.c.b16 %v811, %v807
    %v1032 = vpack.c.b16 %v816, %v812
    %v1033 = vpack.c.b16 %v817, %v813
    %v1034 = vpack.c.b16 %v818, %v814
    %v1035 = vpack.c.b16 %v819, %v815
    %v1036 = vpack.c.b16 %v824, %v820
    %v1037 = vpack.c.b16 %v825, %v821
    %v1038 = vpack.c.b16 %v826, %v822
    %v1039 = vpack.c.b16 %v827, %v823
    %v1040 = vpack.c.b16 %v832, %v828
    %v1041 = vpack.c.b16 %v833, %v829
    %v1042 = vpack.c.b16 %v834, %v830
    %v1043 = vpack.c.b16 %v835, %v831
    %v1044 = vpack.c.b16 %v840, %v836
    %v1045 = vpack.c.b16 %v841, %v837
    %v1046 = vpack.c.b16 %v842, %v838
    %v1047 = vpack.c.b16 %v843, %v839
    %v1048 = vpack.c.b16 %v848, %v844
    %v1049 = vpack.c.b16 %v849, %v845
    %v1050 = vpack.c.b16 %v850, %v846
    %v1051 = vpack.c.b16 %v851, %v847
    %v1052 = vpack.c.b16 %v856, %v852
    %v1053 = vpack.c.b16 %v857, %v853
    %v1054 = vpack.c.b16 %v858, %v854
    %v1055 = vpack.c.b16 %v859, %v855
    %vm1252 = vcmask 130048
    %v1254 = vsel %vm1252, %v53, 0
    %1256 = vmatprep.subr.bf16.mxu0 %v861
    %1257 = vmatpush1.bf16.msra.mxu0 %v860
    %1258 = vmatprep.subr.bf16.mxu0 %v865
    %1259 = vmatpush1.bf16.msra.mxu0 %v864
    %1260 = vmatprep.subr.bf16.mxu0 %v869
    %1261 = vmatpush1.bf16.msra.mxu0 %v868
    %1262 = vmatprep.subr.bf16.mxu0 %v873
    %1263 = vmatpush1.bf16.msra.mxu0 %v872
    %1264 = vmatprep.subr.bf16.mxu0 %v877
    %1265 = vmatpush1.bf16.msra.mxu0 %v876
    %1266 = vmatprep.subr.bf16.mxu0 %v881
    %1267 = vmatpush1.bf16.msra.mxu0 %v880
    %1268 = vmatprep.subr.bf16.mxu0 %v885
    %1269 = vmatpush1.bf16.msra.mxu0 %v884
    %1270 = vmatprep.subr.bf16.mxu0 %v889
    %1271 = vmatpush1.bf16.msra.mxu0 %v888
    %1272 = vmatprep.subr.bf16.mxu0 %v893
    %1273 = vmatpush1.bf16.msra.mxu0 %v892
    %1274 = vmatprep.subr.bf16.mxu0 %v897
    %1275 = vmatpush1.bf16.msra.mxu0 %v896
    %1276 = vmatprep.subr.bf16.mxu0 %v901
    %1277 = vmatpush1.bf16.msra.mxu0 %v900
    %1278 = vmatprep.subr.bf16.mxu0 %v905
    %1279 = vmatpush1.bf16.msra.mxu0 %v904
    %1280 = vmatprep.subr.bf16.mxu0 %v909
    %1281 = vmatpush1.bf16.msra.mxu0 %v908
    %1282 = vmatprep.subr.bf16.mxu0 %v913
    %1283 = vmatpush1.bf16.msra.mxu0 %v912
    %1284 = vmatprep.subr.bf16.mxu0 %v917
    %1285 = vmatpush1.bf16.msra.mxu0 %v916
    %1286 = vmatprep.subr.bf16.mxu0 %v921
    %1287 = vmatpush1.bf16.msra.mxu0 %v920
    %1288 = vmatprep.mubr.bf16.mxu0 %v48
    %1289 = vmatmul.mubr.bf16.gmra.mrb[0].mxu0 %v47
    %v1290 = vpop.f32.mrb[0].mxu0
    %v1291 = vadd.f32 %v255, %v1290
    %v1292 = vpop.f32.mrb[0].mxu0
    %v1293 = vadd.f32 %v259, %v1292
    %v1294 = vpop.f32.mrb[0].mxu0
    %v1295 = vpop.f32.mrb[0].mxu0
    %1296 = vdwg.mxu0
    %1297 = vmatprep.subr.bf16.mxu0 %v925
    %1298 = vmatpush1.bf16.msra.mxu0 %v924
    %1299 = vmatprep.subr.bf16.mxu0 %v929
    %1300 = vmatpush1.bf16.msra.mxu0 %v928
    %1301 = vmatprep.subr.bf16.mxu0 %v933
    %1302 = vmatpush1.bf16.msra.mxu0 %v932
    %1303 = vmatprep.subr.bf16.mxu0 %v937
    %1304 = vmatpush1.bf16.msra.mxu0 %v936
    %1305 = vmatprep.subr.bf16.mxu0 %v941
    %1306 = vmatpush1.bf16.msra.mxu0 %v940
    %1307 = vmatprep.subr.bf16.mxu0 %v945
    %1308 = vmatpush1.bf16.msra.mxu0 %v944
    %1309 = vmatprep.subr.bf16.mxu0 %v949
    %1310 = vmatpush1.bf16.msra.mxu0 %v948
    %1311 = vmatprep.subr.bf16.mxu0 %v953
    %1312 = vmatpush1.bf16.msra.mxu0 %v952
    %1313 = vmatprep.subr.bf16.mxu0 %v957
    %1314 = vmatpush1.bf16.msra.mxu0 %v956
    %1315 = vmatprep.subr.bf16.mxu0 %v961
    %1316 = vmatpush1.bf16.msra.mxu0 %v960
    %1317 = vmatprep.subr.bf16.mxu0 %v965
    %1318 = vmatpush1.bf16.msra.mxu0 %v964
    %1319 = vmatprep.subr.bf16.mxu0 %v969
    %1320 = vmatpush1.bf16.msra.mxu0 %v968
    %1321 = vmatprep.subr.bf16.mxu0 %v973
    %1322 = vmatpush1.bf16.msra.mxu0 %v972
    %1323 = vmatprep.subr.bf16.mxu0 %v977
    %1324 = vmatpush1.bf16.msra.mxu0 %v976
    %1325 = vmatprep.subr.bf16.mxu0 %v981
    %1326 = vmatpush1.bf16.msra.mxu0 %v980
    %1327 = vmatprep.subr.bf16.mxu0 %v985
    %1328 = vmatpush1.bf16.msra.mxu0 %v984
    %1329 = vmatprep.mubr.bf16.mxu0 %v50
    %1330 = vmatmul.mubr.bf16.gmra.mrb[0].mxu0 %v49
    %v1331 = vpop.f32.mrb[0].mxu0
    %v1332 = vadd.f32 %v1291, %v1331
    %v1333 = vpop.f32.mrb[0].mxu0
    %v1334 = vadd.f32 %v1293, %v1333
    %v1335 = vpop.f32.mrb[0].mxu0
    %v1336 = vpop.f32.mrb[0].mxu0
    %1337 = vdwg.mxu0
    %1338 = vmatprep.subr.bf16.mxu0 %v989
    %1339 = vmatpush1.bf16.msra.mxu0 %v988
    %1340 = vmatprep.subr.bf16.mxu0 %v993
    %1341 = vmatpush1.bf16.msra.mxu0 %v992
    %1342 = vmatprep.subr.bf16.mxu0 %v997
    %1343 = vmatpush1.bf16.msra.mxu0 %v996
    %1344 = vmatprep.subr.bf16.mxu0 %v1001
    %1345 = vmatpush1.bf16.msra.mxu0 %v1000
    %1346 = vmatprep.subr.bf16.mxu0 %v1005
    %1347 = vmatpush1.bf16.msra.mxu0 %v1004
    %1348 = vmatprep.subr.bf16.mxu0 %v1009
    %1349 = vmatpush1.bf16.msra.mxu0 %v1008
    %1350 = vmatprep.subr.bf16.mxu0 %v1013
    %1351 = vmatpush1.bf16.msra.mxu0 %v1012
    %1352 = vmatprep.subr.bf16.mxu0 %v1017
    %1353 = vmatpush1.bf16.msra.mxu0 %v1016
    %1354 = vmatprep.subr.bf16.mxu0 %v1021
    %1355 = vmatpush1.bf16.msra.mxu0 %v1020
    %1356 = vmatprep.subr.bf16.mxu0 %v1025
    %1357 = vmatpush1.bf16.msra.mxu0 %v1024
    %1358 = vmatprep.subr.bf16.mxu0 %v1029
    %1359 = vmatpush1.bf16.msra.mxu0 %v1028
    %1360 = vmatprep.subr.bf16.mxu0 %v1033
    %1361 = vmatpush1.bf16.msra.mxu0 %v1032
    %1362 = vmatprep.subr.bf16.mxu0 %v1037
    %1363 = vmatpush1.bf16.msra.mxu0 %v1036
    %1364 = vmatprep.subr.bf16.mxu0 %v1041
    %1365 = vmatpush1.bf16.msra.mxu0 %v1040
    %1366 = vmatprep.subr.bf16.mxu0 %v1045
    %1367 = vmatpush1.bf16.msra.mxu0 %v1044
    %1368 = vmatprep.subr.bf16.mxu0 %v1049
    %1369 = vmatpush1.bf16.msra.mxu0 %v1048
    %1370 = vmatprep.mubr.bf16.mxu0 %v52
    %1371 = vmatmul.mubr.bf16.gmra.mrb[0].mxu0 %v51
    %v1372 = vpop.f32.mrb[0].mxu0
    %v1373 = vadd.f32 %v1332, %v1372
    %v1374 = vpop.f32.mrb[0].mxu0
    %v1375 = vadd.f32 %v1334, %v1374
    %v1376 = vpop.f32.mrb[0].mxu0
    %v1377 = vpop.f32.mrb[0].mxu0
    %1378 = vdwg.mxu0
    %1379 = vmatprep.subr.bf16.mxu0 %v1053
    %1380 = vmatpush1.bf16.msra.mxu0 %v1052
    %1381 = vmatprep.subr.bf16.mxu0 0
    %1382 = vmatpush1.bf16.msra.mxu0 0
    %1383 = vmatprep.subr.bf16.mxu0 0
    %1384 = vmatpush1.bf16.msra.mxu0 0
    %1385 = vmatprep.subr.bf16.mxu0 0
    %1386 = vmatpush1.bf16.msra.mxu0 0
    %1387 = vmatprep.subr.bf16.mxu0 0
    %1388 = vmatpush1.bf16.msra.mxu0 0
    %1389 = vmatprep.subr.bf16.mxu0 0
    %1390 = vmatpush1.bf16.msra.mxu0 0
    %1391 = vmatprep.subr.bf16.mxu0 0
    %1392 = vmatpush1.bf16.msra.mxu0 0
    %1393 = vmatprep.subr.bf16.mxu0 0
    %1394 = vmatpush1.bf16.msra.mxu0 0
    %1395 = vmatprep.subr.bf16.mxu0 0
    %1396 = vmatpush1.bf16.msra.mxu0 0
    %1397 = vmatprep.subr.bf16.mxu0 0
    %1398 = vmatpush1.bf16.msra.mxu0 0
    %1399 = vmatprep.subr.bf16.mxu0 0
    %1400 = vmatpush1.bf16.msra.mxu0 0
    %1401 = vmatprep.subr.bf16.mxu0 0
    %1402 = vmatpush1.bf16.msra.mxu0 0
    %1403 = vmatprep.subr.bf16.mxu0 0
    %1404 = vmatpush1.bf16.msra.mxu0 0
    %1405 = vmatprep.subr.bf16.mxu0 0
    %1406 = vmatpush1.bf16.msra.mxu0 0
    %1407 = vmatprep.subr.bf16.mxu0 0
    %1408 = vmatpush1.bf16.msra.mxu0 0
    %1409 = vmatprep.subr.bf16.mxu0 0
    %1410 = vmatpush1.bf16.msra.mxu0 0
    %1411 = vmatprep.mubr.bf16.mxu0 0
    %1412 = vmatmul.mubr.bf16.gmra.mrb[0].mxu0 %v1254
    %v1413 = vpop.f32.mrb[0].mxu0
    %v1414 = vadd.f32 %v1373, %v1413
    %v1415 = vpop.f32.mrb[0].mxu0
    %v1416 = vadd.f32 %v1375, %v1415
    %v1417 = vpop.f32.mrb[0].mxu0
    %v1418 = vpop.f32.mrb[0].mxu0
    %1419 = vdwg.mxu0
    %1420 = vmatprep.subr.bf16.mxu0 %v863
    %1421 = vmatpush1.bf16.msra.mxu0 %v862
    %1422 = vmatprep.subr.bf16.mxu0 %v867
    %1423 = vmatpush1.bf16.msra.mxu0 %v866
    %1424 = vmatprep.subr.bf16.mxu0 %v871
    %1425 = vmatpush1.bf16.msra.mxu0 %v870
    %1426 = vmatprep.subr.bf16.mxu0 %v875
    %1427 = vmatpush1.bf16.msra.mxu0 %v874
    %1428 = vmatprep.subr.bf16.mxu0 %v879
    %1429 = vmatpush1.bf16.msra.mxu0 %v878
    %1430 = vmatprep.subr.bf16.mxu0 %v883
    %1431 = vmatpush1.bf16.msra.mxu0 %v882
    %1432 = vmatprep.subr.bf16.mxu0 %v887
    %1433 = vmatpush1.bf16.msra.mxu0 %v886
    %1434 = vmatprep.subr.bf16.mxu0 %v891
    %1435 = vmatpush1.bf16.msra.mxu0 %v890
    %1436 = vmatprep.subr.bf16.mxu0 %v895
    %1437 = vmatpush1.bf16.msra.mxu0 %v894
    %1438 = vmatprep.subr.bf16.mxu0 %v899
    %1439 = vmatpush1.bf16.msra.mxu0 %v898
    %1440 = vmatprep.subr.bf16.mxu0 %v903
    %1441 = vmatpush1.bf16.msra.mxu0 %v902
    %1442 = vmatprep.subr.bf16.mxu0 %v907
    %1443 = vmatpush1.bf16.msra.mxu0 %v906
    %1444 = vmatprep.subr.bf16.mxu0 %v911
    %1445 = vmatpush1.bf16.msra.mxu0 %v910
    %1446 = vmatprep.subr.bf16.mxu0 %v915
    %1447 = vmatpush1.bf16.msra.mxu0 %v914
    %1448 = vmatprep.subr.bf16.mxu0 %v919
    %1449 = vmatpush1.bf16.msra.mxu0 %v918
    %1450 = vmatprep.subr.bf16.mxu0 %v923
    %1451 = vmatpush1.bf16.msra.mxu0 %v922
    %1452 = vmatprep.mubr.bf16.mxu0 %v48
    %1453 = vmatmul.mubr.bf16.gmra.mrb[0].mxu0 %v47
    %v1454 = vpop.f32.mrb[0].mxu0
    %v1455 = vadd.f32 %v263, %v1454
    %v1456 = vpop.f32.mrb[0].mxu0
    %v1457 = vadd.f32 %v267, %v1456
    %v1458 = vpop.f32.mrb[0].mxu0
    %v1459 = vpop.f32.mrb[0].mxu0
    %1460 = vdwg.mxu0
    %1461 = vmatprep.subr.bf16.mxu0 %v927
    %1462 = vmatpush1.bf16.msra.mxu0 %v926
    %1463 = vmatprep.subr.bf16.mxu0 %v931
    %1464 = vmatpush1.bf16.msra.mxu0 %v930
    %1465 = vmatprep.subr.bf16.mxu0 %v935
    %1466 = vmatpush1.bf16.msra.mxu0 %v934
    %1467 = vmatprep.subr.bf16.mxu0 %v939
    %1468 = vmatpush1.bf16.msra.mxu0 %v938
    %1469 = vmatprep.subr.bf16.mxu0 %v943
    %1470 = vmatpush1.bf16.msra.mxu0 %v942
    %1471 = vmatprep.subr.bf16.mxu0 %v947
    %1472 = vmatpush1.bf16.msra.mxu0 %v946
    %1473 = vmatprep.subr.bf16.mxu0 %v951
    %1474 = vmatpush1.bf16.msra.mxu0 %v950
    %1475 = vmatprep.subr.bf16.mxu0 %v955
    %1476 = vmatpush1.bf16.msra.mxu0 %v954
    %1477 = vmatprep.subr.bf16.mxu0 %v959
    %1478 = vmatpush1.bf16.msra.mxu0 %v958
    %1479 = vmatprep.subr.bf16.mxu0 %v963
    %1480 = vmatpush1.bf16.msra.mxu0 %v962
    %1481 = vmatprep.subr.bf16.mxu0 %v967
    %1482 = vmatpush1.bf16.msra.mxu0 %v966
    %1483 = vmatprep.subr.bf16.mxu0 %v971
    %1484 = vmatpush1.bf16.msra.mxu0 %v970
    %1485 = vmatprep.subr.bf16.mxu0 %v975
    %1486 = vmatpush1.bf16.msra.mxu0 %v974
    %1487 = vmatprep.subr.bf16.mxu0 %v979
    %1488 = vmatpush1.bf16.msra.mxu0 %v978
    %1489 = vmatprep.subr.bf16.mxu0 %v983
    %1490 = vmatpush1.bf16.msra.mxu0 %v982
    %1491 = vmatprep.subr.bf16.mxu0 %v987
    %1492 = vmatpush1.bf16.msra.mxu0 %v986
    %1493 = vmatprep.mubr.bf16.mxu0 %v50
    %1494 = vmatmul.mubr.bf16.gmra.mrb[0].mxu0 %v49
    %v1495 = vpop.f32.mrb[0].mxu0
    %v1496 = vadd.f32 %v1455, %v1495
    %v1497 = vpop.f32.mrb[0].mxu0
    %v1498 = vadd.f32 %v1457, %v1497
    %v1499 = vpop.f32.mrb[0].mxu0
    %v1500 = vpop.f32.mrb[0].mxu0
    %1501 = vdwg.mxu0
    %1502 = vmatprep.subr.bf16.mxu0 %v991
    %1503 = vmatpush1.bf16.msra.mxu0 %v990
    %1504 = vmatprep.subr.bf16.mxu0 %v995
    %1505 = vmatpush1.bf16.msra.mxu0 %v994
    %1506 = vmatprep.subr.bf16.mxu0 %v999
    %1507 = vmatpush1.bf16.msra.mxu0 %v998
    %1508 = vmatprep.subr.bf16.mxu0 %v1003
    %1509 = vmatpush1.bf16.msra.mxu0 %v1002
    %1510 = vmatprep.subr.bf16.mxu0 %v1007
    %1511 = vmatpush1.bf16.msra.mxu0 %v1006
    %1512 = vmatprep.subr.bf16.mxu0 %v1011
    %1513 = vmatpush1.bf16.msra.mxu0 %v1010
    %1514 = vmatprep.subr.bf16.mxu0 %v1015
    %1515 = vmatpush1.bf16.msra.mxu0 %v1014
    %1516 = vmatprep.subr.bf16.mxu0 %v1019
    %1517 = vmatpush1.bf16.msra.mxu0 %v1018
    %1518 = vmatprep.subr.bf16.mxu0 %v1023
    %1519 = vmatpush1.bf16.msra.mxu0 %v1022
    %1520 = vmatprep.subr.bf16.mxu0 %v1027
    %1521 = vmatpush1.bf16.msra.mxu0 %v1026
    %1522 = vmatprep.subr.bf16.mxu0 %v1031
    %1523 = vmatpush1.bf16.msra.mxu0 %v1030
    %1524 = vmatprep.subr.bf16.mxu0 %v1035
    %1525 = vmatpush1.bf16.msra.mxu0 %v1034
    %1526 = vmatprep.subr.bf16.mxu0 %v1039
    %1527 = vmatpush1.bf16.msra.mxu0 %v1038
    %1528 = vmatprep.subr.bf16.mxu0 %v1043
    %1529 = vmatpush1.bf16.msra.mxu0 %v1042
    %1530 = vmatprep.subr.bf16.mxu0 %v1047
    %1531 = vmatpush1.bf16.msra.mxu0 %v1046
    %1532 = vmatprep.subr.bf16.mxu0 %v1051
    %1533 = vmatpush1.bf16.msra.mxu0 %v1050
    %1534 = vmatprep.mubr.bf16.mxu0 %v52
    %1535 = vmatmul.mubr.bf16.gmra.mrb[0].mxu0 %v51
    %v1536 = vpop.f32.mrb[0].mxu0
    %v1537 = vadd.f32 %v1496, %v1536
    %v1538 = vpop.f32.mrb[0].mxu0
    %v1539 = vadd.f32 %v1498, %v1538
    %v1540 = vpop.f32.mrb[0].mxu0
    %v1541 = vpop.f32.mrb[0].mxu0
    %1542 = vdwg.mxu0
    %1543 = vmatprep.subr.bf16.mxu0 %v1055
    %1544 = vmatpush1.bf16.msra.mxu0 %v1054
    %1545 = vmatprep.subr.bf16.mxu0 0
    %1546 = vmatpush1.bf16.msra.mxu0 0
    %1547 = vmatprep.subr.bf16.mxu0 0
    %1548 = vmatpush1.bf16.msra.mxu0 0
    %1549 = vmatprep.subr.bf16.mxu0 0
    %1550 = vmatpush1.bf16.msra.mxu0 0
    %1551 = vmatprep.subr.bf16.mxu0 0
    %1552 = vmatpush1.bf16.msra.mxu0 0
    %1553 = vmatprep.subr.bf16.mxu0 0
    %1554 = vmatpush1.bf16.msra.mxu0 0
    %1555 = vmatprep.subr.bf16.mxu0 0
    %1556 = vmatpush1.bf16.msra.mxu0 0
    %1557 = vmatprep.subr.bf16.mxu0 0
    %1558 = vmatpush1.bf16.msra.mxu0 0
    %1559 = vmatprep.subr.bf16.mxu0 0
    %1560 = vmatpush1.bf16.msra.mxu0 0
    %1561 = vmatprep.subr.bf16.mxu0 0
    %1562 = vmatpush1.bf16.msra.mxu0 0
    %1563 = vmatprep.subr.bf16.mxu0 0
    %1564 = vmatpush1.bf16.msra.mxu0 0
    %1565 = vmatprep.subr.bf16.mxu0 0
    %1566 = vmatpush1.bf16.msra.mxu0 0
    %1567 = vmatprep.subr.bf16.mxu0 0
    %1568 = vmatpush1.bf16.msra.mxu0 0
    %1569 = vmatprep.subr.bf16.mxu0 0
    %1570 = vmatpush1.bf16.msra.mxu0 0
    %1571 = vmatprep.subr.bf16.mxu0 0
    %1572 = vmatpush1.bf16.msra.mxu0 0
    %1573 = vmatprep.subr.bf16.mxu0 0
    %1574 = vmatpush1.bf16.msra.mxu0 0
    %1575 = vmatprep.mubr.bf16.mxu0 0
    %1576 = vmatmul.mubr.bf16.gmra.mrb[0].mxu0 %v1254
    %v1577 = vpop.f32.mrb[0].mxu0
    %v1578 = vadd.f32 %v1537, %v1577
    %v1579 = vpop.f32.mrb[0].mxu0
    %v1580 = vadd.f32 %v1539, %v1579
    %v1581 = vpop.f32.mrb[0].mxu0
    %v1582 = vpop.f32.mrb[0].mxu0
    %1583 = vdwg.mxu0
    %v1584 = vmax.f32 %v1414, 0.0
    %v1585 = vmax.f32 %v1416, 0.0
    %v1586 = vmax.f32 %v1578, 0.0
    %v1587 = vmax.f32 %v1580, 0.0
    %v1588 = vpack.c.bf16 %v1584, %v1584
    %v1589 = vpack.c.bf16 %v1585, %v1585
    %v1590 = vpack.c.bf16 %v1586, %v1586
    %v1591 = vpack.c.bf16 %v1587, %v1587
    %v1592 = vld [vmem:[%s4] sm:$0xf]
    %v1593 = vld [vmem:[%s4 + $0x4] sm:$0xf]
    %v1594 = vld [vmem:[%s4 + $0x8] sm:$0xf]
    %v1595 = vld [vmem:[%s4 + $0xc] sm:$0xf]
    %v1596 = vld [vmem:[%s4 + $0x10] sm:$0xf]
    %v1597 = vld [vmem:[%s4 + $0x14] sm:$0xf]
    %v1598 = vld [vmem:[%s4 + $0x18] sm:$0xf]
    %v1599 = vld [vmem:[%s4 + $0x1c] sm:$0xf]
    %v1600 = vld [vmem:[%s4 + $0x20] sm:$0xf]
    %v1601 = vld [vmem:[%s4 + $0x24] sm:$0xf]
    %v1602 = vld [vmem:[%s4 + $0x28] sm:$0xf]
    %v1603 = vld [vmem:[%s4 + $0x2c] sm:$0xf]
    %v1604 = vld [vmem:[%s4 + $0x30] sm:$0xf]
    %v1605 = vld [vmem:[%s4 + $0x34] sm:$0xf]
    %v1606 = vld [vmem:[%s4 + $0x38] sm:$0xf]
    %v1607 = vld [vmem:[%s4 + $0x3c] sm:$0xf]
    %v1608 = vld [vmem:[%s4 + $0x40] sm:$0xf]
    %v1609 = vld [vmem:[%s4 + $0x44] sm:$0xf]
    %v1610 = vld [vmem:[%s4 + $0x48] sm:$0xf]
    %v1611 = vld [vmem:[%s4 + $0x4c] sm:$0xf]
    %v1612 = vld [vmem:[%s4 + $0x50] sm:$0xf]
    %v1613 = vld [vmem:[%s4 + $0x54] sm:$0xf]
    %v1614 = vld [vmem:[%s4 + $0x58] sm:$0xf]
    %v1615 = vld [vmem:[%s4 + $0x5c] sm:$0xf]
    %v1616 = vld [vmem:[%s4 + $0x60] sm:$0xf]
    %v1617 = vld [vmem:[%s4 + $0x64] sm:$0xf]
    %v1618 = vld [vmem:[%s4 + $0x68] sm:$0xf]
    %v1619 = vld [vmem:[%s4 + $0x6c] sm:$0xf]
    %v1620 = vld [vmem:[%s4 + $0x70] sm:$0xf]
    %v1621 = vld [vmem:[%s4 + $0x74] sm:$0xf]
    %v1622 = vld [vmem:[%s4 + $0x78] sm:$0xf]
    %v1623 = vld [vmem:[%s4 + $0x7c] sm:$0xf]
    %v1624 = vld [vmem:[%s4 + $0x80] sm:$0xf]
    %v1625 = vld [vmem:[%s4 + $0x84] sm:$0xf]
    %v1626 = vld [vmem:[%s4 + $0x88] sm:$0xf]
    %v1627 = vld [vmem:[%s4 + $0x8c] sm:$0xf]
    %v1628 = vld [vmem:[%s4 + $0x90] sm:$0xf]
    %v1629 = vld [vmem:[%s4 + $0x94] sm:$0xf]
    %v1630 = vld [vmem:[%s4 + $0x98] sm:$0xf]
    %v1631 = vld [vmem:[%s4 + $0x9c] sm:$0xf]
    %v1632 = vld [vmem:[%s4 + $0xa0] sm:$0xf]
    %v1633 = vld [vmem:[%s4 + $0xa4] sm:$0xf]
    %v1634 = vld [vmem:[%s4 + $0xa8] sm:$0xf]
    %v1635 = vld [vmem:[%s4 + $0xac] sm:$0xf]
    %v1636 = vld [vmem:[%s4 + $0xb0] sm:$0xf]
    %v1637 = vld [vmem:[%s4 + $0xb4] sm:$0xf]
    %v1638 = vld [vmem:[%s4 + $0xb8] sm:$0xf]
    %v1639 = vld [vmem:[%s4 + $0xbc] sm:$0xf]
    %v1640 = vld [vmem:[%s4 + $0xc0] sm:$0xf]
    %v1641 = vld [vmem:[%s4 + $0xc4] sm:$0xf]
    %v1642 = vld [vmem:[%s5] sm:$0x1]
    %v1644 = vlaneseq
    %v1645 = vshrl.u32 %v1644, 7
    %v1646 = vsub.s32 0, %v1645
    %v1647 = vrot.slane %v1642, %v1646
    %v1699 = vunpack.c.l.b16 %v1592
    %v1700 = vunpack.c.l.b16 %v1593
    %v1701 = vunpack.c.l.b16 %v1594
    %v1702 = vunpack.c.l.b16 %v1595
    %v1703 = vunpack.c.l.b16 %v1596
    %v1704 = vunpack.c.l.b16 %v1597
    %v1705 = vunpack.c.l.b16 %v1598
    %v1706 = vunpack.c.l.b16 %v1599
    %v1707 = vunpack.c.l.b16 %v1600
    %v1708 = vunpack.c.l.b16 %v1601
    %v1709 = vunpack.c.l.b16 %v1602
    %v1710 = vunpack.c.l.b16 %v1603
    %v1711 = vunpack.c.l.b16 %v1604
    %v1712 = vunpack.c.l.b16 %v1605
    %v1713 = vunpack.c.l.b16 %v1606
    %v1714 = vunpack.c.l.b16 %v1607
    %v1715 = vunpack.c.l.b16 %v1608
    %v1716 = vunpack.c.l.b16 %v1609
    %v1717 = vunpack.c.l.b16 %v1610
    %v1718 = vunpack.c.l.b16 %v1611
    %v1719 = vunpack.c.l.b16 %v1612
    %v1720 = vunpack.c.l.b16 %v1613
    %v1721 = vunpack.c.l.b16 %v1614
    %v1722 = vunpack.c.l.b16 %v1615
    %v1723 = vunpack.c.l.b16 %v1616
    %v1724 = vunpack.c.l.b16 %v1617
    %v1725 = vunpack.c.l.b16 %v1618
    %v1726 = vunpack.c.l.b16 %v1619
    %v1727 = vunpack.c.l.b16 %v1620
    %v1728 = vunpack.c.l.b16 %v1621
    %v1729 = vunpack.c.l.b16 %v1622
    %v1730 = vunpack.c.l.b16 %v1623
    %v1731 = vunpack.c.l.b16 %v1624
    %v1732 = vunpack.c.l.b16 %v1625
    %v1733 = vunpack.c.l.b16 %v1626
    %v1734 = vunpack.c.l.b16 %v1627
    %v1735 = vunpack.c.l.b16 %v1628
    %v1736 = vunpack.c.l.b16 %v1629
    %v1737 = vunpack.c.l.b16 %v1630
    %v1738 = vunpack.c.l.b16 %v1631
    %v1739 = vunpack.c.l.b16 %v1632
    %v1740 = vunpack.c.l.b16 %v1633
    %v1741 = vunpack.c.l.b16 %v1634
    %v1742 = vunpack.c.l.b16 %v1635
    %v1743 = vunpack.c.l.b16 %v1636
    %v1744 = vunpack.c.l.b16 %v1637
    %v1745 = vunpack.c.l.b16 %v1638
    %v1746 = vunpack.c.l.b16 %v1639
    %v1747 = vunpack.c.l.b16 %v1640
    %v1748 = vunpack.c.l.b16 %v1641
    %v1749 = vpack.c.b16 %v1700, %v1699
    %v1750 = vpack.c.b16 %v1702, %v1701
    %v1751 = vpack.c.b16 %v1704, %v1703
    %v1752 = vpack.c.b16 %v1706, %v1705
    %v1753 = vpack.c.b16 %v1708, %v1707
    %v1754 = vpack.c.b16 %v1710, %v1709
    %v1755 = vpack.c.b16 %v1712, %v1711
    %v1756 = vpack.c.b16 %v1714, %v1713
    %v1757 = vpack.c.b16 %v1716, %v1715
    %v1758 = vpack.c.b16 %v1718, %v1717
    %v1759 = vpack.c.b16 %v1720, %v1719
    %v1760 = vpack.c.b16 %v1722, %v1721
    %v1761 = vpack.c.b16 %v1724, %v1723
    %v1762 = vpack.c.b16 %v1726, %v1725
    %v1763 = vpack.c.b16 %v1728, %v1727
    %v1764 = vpack.c.b16 %v1730, %v1729
    %v1765 = vpack.c.b16 %v1732, %v1731
    %v1766 = vpack.c.b16 %v1734, %v1733
    %v1767 = vpack.c.b16 %v1736, %v1735
    %v1768 = vpack.c.b16 %v1738, %v1737
    %v1769 = vpack.c.b16 %v1740, %v1739
    %v1770 = vpack.c.b16 %v1742, %v1741
    %v1771 = vpack.c.b16 %v1744, %v1743
    %v1772 = vpack.c.b16 %v1746, %v1745
    %v1773 = vpack.c.b16 %v1748, %v1747
    %v1800 = vsel %vm1252, %v1591, 0
    %1802 = vmatprep.subr.bf16.mxu0 0
    %1803 = vmatpush1.bf16.msra.mxu0 %v1749
    %1804 = vmatprep.subr.bf16.mxu0 0
    %1805 = vmatpush1.bf16.msra.mxu0 %v1750
    %1806 = vmatprep.subr.bf16.mxu0 0
    %1807 = vmatpush1.bf16.msra.mxu0 %v1751
    %1808 = vmatprep.subr.bf16.mxu0 0
    %1809 = vmatpush1.bf16.msra.mxu0 %v1752
    %1810 = vmatprep.subr.bf16.mxu0 0
    %1811 = vmatpush1.bf16.msra.mxu0 %v1753
    %1812 = vmatprep.subr.bf16.mxu0 0
    %1813 = vmatpush1.bf16.msra.mxu0 %v1754
    %1814 = vmatprep.subr.bf16.mxu0 0
    %1815 = vmatpush1.bf16.msra.mxu0 %v1755
    %1816 = vmatprep.subr.bf16.mxu0 0
    %1817 = vmatpush1.bf16.msra.mxu0 %v1756
    %1818 = vmatprep.subr.bf16.mxu0 0
    %1819 = vmatpush1.bf16.msra.mxu0 %v1757
    %1820 = vmatprep.subr.bf16.mxu0 0
    %1821 = vmatpush1.bf16.msra.mxu0 %v1758
    %1822 = vmatprep.subr.bf16.mxu0 0
    %1823 = vmatpush1.bf16.msra.mxu0 %v1759
    %1824 = vmatprep.subr.bf16.mxu0 0
    %1825 = vmatpush1.bf16.msra.mxu0 %v1760
    %1826 = vmatprep.subr.bf16.mxu0 0
    %1827 = vmatpush1.bf16.msra.mxu0 %v1761
    %1828 = vmatprep.subr.bf16.mxu0 0
    %1829 = vmatpush1.bf16.msra.mxu0 %v1762
    %1830 = vmatprep.subr.bf16.mxu0 0
    %1831 = vmatpush1.bf16.msra.mxu0 %v1763
    %1832 = vmatprep.subr.bf16.mxu0 0
    %1833 = vmatpush1.bf16.msra.mxu0 %v1764
    %1834 = vmatprep.mubr.bf16.mxu0 %v1589
    %1835 = vmatmul.mubr.bf16.gmra.mrb[0].mxu0 %v1588
    %v1836 = vpop.f32.mrb[0].mxu0
    %v1837 = vadd.f32 %v1647, %v1836
    %v1838 = vpop.f32.mrb[0].mxu0
    %v1839 = vpop.f32.mrb[0].mxu0
    %v1840 = vpop.f32.mrb[0].mxu0
    %1841 = vdwg.mxu0
    %1842 = vmatprep.subr.bf16.mxu0 0
    %1843 = vmatpush1.bf16.msra.mxu0 %v1765
    %1844 = vmatprep.subr.bf16.mxu0 0
    %1845 = vmatpush1.bf16.msra.mxu0 %v1766
    %1846 = vmatprep.subr.bf16.mxu0 0
    %1847 = vmatpush1.bf16.msra.mxu0 %v1767
    %1848 = vmatprep.subr.bf16.mxu0 0
    %1849 = vmatpush1.bf16.msra.mxu0 %v1768
    %1850 = vmatprep.subr.bf16.mxu0 0
    %1851 = vmatpush1.bf16.msra.mxu0 %v1769
    %1852 = vmatprep.subr.bf16.mxu0 0
    %1853 = vmatpush1.bf16.msra.mxu0 %v1770
    %1854 = vmatprep.subr.bf16.mxu0 0
    %1855 = vmatpush1.bf16.msra.mxu0 %v1771
    %1856 = vmatprep.subr.bf16.mxu0 0
    %1857 = vmatpush1.bf16.msra.mxu0 %v1772
    %1858 = vmatprep.subr.bf16.mxu0 0
    %1859 = vmatpush1.bf16.msra.mxu0 %v1773
    %1860 = vmatprep.subr.bf16.mxu0 0
    %1861 = vmatpush1.bf16.msra.mxu0 0
    %1862 = vmatprep.subr.bf16.mxu0 0
    %1863 = vmatpush1.bf16.msra.mxu0 0
    %1864 = vmatprep.subr.bf16.mxu0 0
    %1865 = vmatpush1.bf16.msra.mxu0 0
    %1866 = vmatprep.subr.bf16.mxu0 0
    %1867 = vmatpush1.bf16.msra.mxu0 0
    %1868 = vmatprep.subr.bf16.mxu0 0
    %1869 = vmatpush1.bf16.msra.mxu0 0
    %1870 = vmatprep.subr.bf16.mxu0 0
    %1871 = vmatpush1.bf16.msra.mxu0 0
    %1872 = vmatprep.subr.bf16.mxu0 0
    %1873 = vmatpush1.bf16.msra.mxu0 0
    %1874 = vmatprep.mubr.bf16.mxu0 %v1800
    %1875 = vmatmul.mubr.bf16.gmra.mrb[0].mxu0 %v1590
    %v1876 = vpop.f32.mrb[0].mxu0
    %v1877 = vadd.f32 %v1837, %v1876
    %v1878 = vpop.f32.mrb[0].mxu0
    %v1879 = vpop.f32.mrb[0].mxu0
    %v1880 = vpop.f32.mrb[0].mxu0
    %1881 = vdwg.mxu0
    %v1882 = vld [vmem:[%s1] sm:$0xff]
    %v1883 = vmul.f32 %v1877, 0.5
    %v1884 = vmul.f32 %v1883, 1.442695
    %v1885 = vpow.pop %v1884
    %1887 = vrot.lane.b32.xlu0 %v1885, 108
    %v1888 = vpop.permute.xlu0 %1887
    %v1890 = vmul.f32 %v1882, %v1888
    %v1891 = vadd.f32 %v1877, %v1890
    %v1892 = vpack.c.bf16 %v1891, %v1891
    %v1893 = vld [vmem:[%s6] sm:$0xff]
    %v1894 = vld [vmem:[%s6 + $0x8] sm:$0xff]
    %v1895 = vld [vmem:[%s6 + $0x10] sm:$0xff]
    %v1896 = vld [vmem:[%s6 + $0x18] sm:$0xff]
    %v1897 = vld [vmem:[%s6 + $0x20] sm:$0x33]
    %v1898 = vld [vmem:[%s6 + $0x28] sm:$0x33]
    %v1899 = vld [vmem:[%s7] sm:$0xf]
    %v1901 = vlaneseq
    %v1902 = vshrl.u32 %v1901, 7
    %v1903 = vsub.s32 0, %v1902
    %v1904 = vrot.slane %v1899, %v1903
    %v1905 = vlaneseq
    %v1906 = vshrl.u32 %v1905, 7
    %v1907 = vsub.s32 1, %v1906
    %v1908 = vrot.slane %v1899, %v1907
    %v1909 = vlaneseq
    %v1910 = vshrl.u32 %v1909, 7
    %v1911 = vsub.s32 2, %v1910
    %v1912 = vrot.slane %v1899, %v1911
    %v1913 = vlaneseq
    %v1914 = vshrl.u32 %v1913, 7
    %v1915 = vsub.s32 3, %v1914
    %v1916 = vrot.slane %v1899, %v1915
    %v1927 = vunpack.c.l.b16 %v1893
    %v1928 = vunpack.c.h.b16 %v1893
    %v1929 = vunpack.c.l.b16 %v1894
    %v1930 = vunpack.c.h.b16 %v1894
    %v1931 = vunpack.c.l.b16 %v1895
    %v1932 = vunpack.c.h.b16 %v1895
    %v1933 = vunpack.c.l.b16 %v1896
    %v1934 = vunpack.c.h.b16 %v1896
    %v1935 = vunpack.c.l.b16 %v1897
    %v1936 = vunpack.c.h.b16 %v1897
    %v1937 = vunpack.c.l.b16 %v1898
    %v1938 = vunpack.c.h.b16 %v1898
    %v1939 = vpack.c.b16 %v1931, %v1927
    %v1940 = vpack.c.b16 %v1932, %v1928
    %v1941 = vpack.c.b16 %v1933, %v1929
    %v1942 = vpack.c.b16 %v1934, %v1930
    %v1943 = vpack.c.b16 %v1935, %v1935
    %v1944 = vpack.c.b16 %v1936, %v1936
    %v1945 = vpack.c.b16 %v1937, %v1937
    %v1946 = vpack.c.b16 %v1938, %v1938
    %vm1951 = vcmask 162816
    %v1953 = vsel %vm1951, %v1892, 0
    %vm1955 = vcmask 1041408
    %v1957 = vsel %vm1955, %v1943, 0
    %v1960 = vsel %vm1955, %v1944, 0
    %v1963 = vsel %vm1955, %v1945, 0
    %v1966 = vsel %vm1955, %v1946, 0
    %1968 = vmatprep.subr.bf16.mxu0 %v1940
    %1969 = vmatpush1.bf16.msra.mxu0 %v1939
    %1970 = vmatprep.subr.bf16.mxu0 %v1960
    %1971 = vmatpush1.bf16.msra.mxu0 %v1957
    %1972 = vmatprep.subr.bf16.mxu0 0
    %1973 = vmatpush1.bf16.msra.mxu0 0
    %1974 = vmatprep.subr.bf16.mxu0 0
    %1975 = vmatpush1.bf16.msra.mxu0 0
    %1976 = vmatprep.subr.bf16.mxu0 0
    %1977 = vmatpush1.bf16.msra.mxu0 0
    %1978 = vmatprep.subr.bf16.mxu0 0
    %1979 = vmatpush1.bf16.msra.mxu0 0
    %1980 = vmatprep.subr.bf16.mxu0 0
    %1981 = vmatpush1.bf16.msra.mxu0 0
    %1982 = vmatprep.subr.bf16.mxu0 0
    %1983 = vmatpush1.bf16.msra.mxu0 0
    %1984 = vmatprep.subr.bf16.mxu0 0
    %1985 = vmatpush1.bf16.msra.mxu0 0
    %1986 = vmatprep.subr.bf16.mxu0 0
    %1987 = vmatpush1.bf16.msra.mxu0 0
    %1988 = vmatprep.subr.bf16.mxu0 0
    %1989 = vmatpush1.bf16.msra.mxu0 0
    %1990 = vmatprep.subr.bf16.mxu0 0
    %1991 = vmatpush1.bf16.msra.mxu0 0
    %1992 = vmatprep.subr.bf16.mxu0 0
    %1993 = vmatpush1.bf16.msra.mxu0 0
    %1994 = vmatprep.subr.bf16.mxu0 0
    %1995 = vmatpush1.bf16.msra.mxu0 0
    %1996 = vmatprep.subr.bf16.mxu0 0
    %1997 = vmatpush1.bf16.msra.mxu0 0
    %1998 = vmatprep.subr.bf16.mxu0 0
    %1999 = vmatpush1.bf16.msra.mxu0 0
    %2000 = vmatprep.mubr.bf16.mxu0 0
    %2001 = vmatmul.mubr.bf16.gmra.mrb[0].mxu0 %v1953
    %v2002 = vpop.f32.mrb[0].mxu0
    %v2003 = vadd.f32 %v1904, %v2002
    %v2004 = vpop.f32.mrb[0].mxu0
    %v2005 = vadd.f32 %v1908, %v2004
    %v2006 = vpop.f32.mrb[0].mxu0
    %v2007 = vpop.f32.mrb[0].mxu0
    %2008 = vdwg.mxu0
    %2009 = vmatprep.subr.bf16.mxu0 %v1942
    %2010 = vmatpush1.bf16.msra.mxu0 %v1941
    %2011 = vmatprep.subr.bf16.mxu0 %v1966
    %2012 = vmatpush1.bf16.msra.mxu0 %v1963
    %2013 = vmatprep.subr.bf16.mxu0 0
    %2014 = vmatpush1.bf16.msra.mxu0 0
    %2015 = vmatprep.subr.bf16.mxu0 0
    %2016 = vmatpush1.bf16.msra.mxu0 0
    %2017 = vmatprep.subr.bf16.mxu0 0
    %2018 = vmatpush1.bf16.msra.mxu0 0
    %2019 = vmatprep.subr.bf16.mxu0 0
    %2020 = vmatpush1.bf16.msra.mxu0 0
    %2021 = vmatprep.subr.bf16.mxu0 0
    %2022 = vmatpush1.bf16.msra.mxu0 0
    %2023 = vmatprep.subr.bf16.mxu0 0
    %2024 = vmatpush1.bf16.msra.mxu0 0
    %2025 = vmatprep.subr.bf16.mxu0 0
    %2026 = vmatpush1.bf16.msra.mxu0 0
    %2027 = vmatprep.subr.bf16.mxu0 0
    %2028 = vmatpush1.bf16.msra.mxu0 0
    %2029 = vmatprep.subr.bf16.mxu0 0
    %2030 = vmatpush1.bf16.msra.mxu0 0
    %2031 = vmatprep.subr.bf16.mxu0 0
    %2032 = vmatpush1.bf16.msra.mxu0 0
    %2033 = vmatprep.subr.bf16.mxu0 0
    %2034 = vmatpush1.bf16.msra.mxu0 0
    %2035 = vmatprep.subr.bf16.mxu0 0
    %2036 = vmatpush1.bf16.msra.mxu0 0
    %2037 = vmatprep.subr.bf16.mxu0 0
    %2038 = vmatpush1.bf16.msra.mxu0 0
    %2039 = vmatprep.subr.bf16.mxu0 0
    %2040 = vmatpush1.bf16.msra.mxu0 0
    %2041 = vmatprep.mubr.bf16.mxu0 0
    %2042 = vmatmul.mubr.bf16.gmra.mrb[0].mxu0 %v1953
    %v2043 = vpop.f32.mrb[0].mxu0
    %v2044 = vadd.f32 %v1912, %v2043
    %v2045 = vpop.f32.mrb[0].mxu0
    %v2046 = vadd.f32 %v1916, %v2045
    %v2047 = vpop.f32.mrb[0].mxu0
    %v2048 = vpop.f32.mrb[0].mxu0
    %2049 = vdwg.mxu0
    %v2050 = vmax.f32 %v2003, 0.0
    %v2051 = vmax.f32 %v2005, 0.0
    %v2052 = vmax.f32 %v2044, 0.0
    %v2053 = vmax.f32 %v2046, 0.0
    %v2054 = vpack.c.bf16 %v2050, %v2050
    %v2055 = vpack.c.bf16 %v2051, %v2051
    %v2056 = vpack.c.bf16 %v2052, %v2052
    %v2057 = vpack.c.bf16 %v2053, %v2053
    %v2058 = vld [vmem:[%s8] sm:$0xff]
    %v2059 = vld [vmem:[%s8 + $0x8] sm:$0xff]
    %v2060 = vld [vmem:[%s8 + $0x10] sm:$0xff]
    %v2061 = vld [vmem:[%s8 + $0x18] sm:$0xf]
    %v2062 = vld [vmem:[%s8 + $0x1c] sm:$0xff]
    %v2063 = vld [vmem:[%s8 + $0x24] sm:$0xff]
    %v2064 = vld [vmem:[%s8 + $0x2c] sm:$0xff]
    %v2065 = vld [vmem:[%s8 + $0x34] sm:$0xf]
    %v2066 = vld [vmem:[%s8 + $0x38] sm:$0xff]
    %v2067 = vld [vmem:[%s8 + $0x40] sm:$0xff]
    %v2068 = vld [vmem:[%s8 + $0x48] sm:$0xff]
    %v2069 = vld [vmem:[%s8 + $0x50] sm:$0xf]
    %v2070 = vld [vmem:[%s8 + $0x54] sm:$0xff]
    %v2071 = vld [vmem:[%s8 + $0x5c] sm:$0xff]
    %v2072 = vld [vmem:[%s8 + $0x64] sm:$0xff]
    %v2073 = vld [vmem:[%s8 + $0x6c] sm:$0xf]
    %v2074 = vld [vmem:[%s8 + $0x70] sm:$0xff]
    %v2075 = vld [vmem:[%s8 + $0x78] sm:$0xff]
    %v2076 = vld [vmem:[%s8 + $0x80] sm:$0xff]
    %v2077 = vld [vmem:[%s8 + $0x88] sm:$0xf]
    %v2078 = vld [vmem:[%s8 + $0x8c] sm:$0xff]
    %v2079 = vld [vmem:[%s8 + $0x94] sm:$0xff]
    %v2080 = vld [vmem:[%s8 + $0x9c] sm:$0xff]
    %v2081 = vld [vmem:[%s8 + $0xa4] sm:$0xf]
    %v2082 = vld [vmem:[%s8 + $0xa8] sm:$0xff]
    %v2083 = vld [vmem:[%s8 + $0xb0] sm:$0xff]
    %v2084 = vld [vmem:[%s8 + $0xb8] sm:$0xff]
    %v2085 = vld [vmem:[%s8 + $0xc0] sm:$0xf]
    %v2086 = vld [vmem:[%s8 + $0xc4] sm:$0xff]
    %v2087 = vld [vmem:[%s8 + $0xcc] sm:$0xff]
    %v2088 = vld [vmem:[%s8 + $0xd4] sm:$0xff]
    %v2089 = vld [vmem:[%s8 + $0xdc] sm:$0xf]
    %v2090 = vld [vmem:[%s8 + $0xe0] sm:$0xff]
    %v2091 = vld [vmem:[%s8 + $0xe8] sm:$0xff]
    %v2092 = vld [vmem:[%s8 + $0xf0] sm:$0xff]
    %v2093 = vld [vmem:[%s8 + $0xf8] sm:$0xf]
    %v2094 = vld [vmem:[%s8 + $0xfc] sm:$0xff]
    %v2095 = vld [vmem:[%s8 + $0x104] sm:$0xff]
    %v2096 = vld [vmem:[%s8 + $0x10c] sm:$0xff]
    %v2097 = vld [vmem:[%s8 + $0x114] sm:$0xf]
    %v2098 = vld [vmem:[%s8 + $0x118] sm:$0xff]
    %v2099 = vld [vmem:[%s8 + $0x120] sm:$0xff]
    %v2100 = vld [vmem:[%s8 + $0x128] sm:$0xff]
    %v2101 = vld [vmem:[%s8 + $0x130] sm:$0xf]
    %v2102 = vld [vmem:[%s8 + $0x134] sm:$0xff]
    %v2103 = vld [vmem:[%s8 + $0x13c] sm:$0xff]
    %v2104 = vld [vmem:[%s8 + $0x144] sm:$0xff]
    %v2105 = vld [vmem:[%s8 + $0x14c] sm:$0xf]
    %v2106 = vld [vmem:[%s8 + $0x150] sm:$0xff]
    %v2107 = vld [vmem:[%s8 + $0x158] sm:$0xff]
    %v2108 = vld [vmem:[%s8 + $0x160] sm:$0xff]
    %v2109 = vld [vmem:[%s8 + $0x168] sm:$0xf]
    %v2110 = vld [vmem:[%s8 + $0x16c] sm:$0xff]
    %v2111 = vld [vmem:[%s8 + $0x174] sm:$0xff]
    %v2112 = vld [vmem:[%s8 + $0x17c] sm:$0xff]
    %v2113 = vld [vmem:[%s8 + $0x184] sm:$0xf]
    %v2114 = vld [vmem:[%s8 + $0x188] sm:$0xff]
    %v2115 = vld [vmem:[%s8 + $0x190] sm:$0xff]
    %v2116 = vld [vmem:[%s8 + $0x198] sm:$0xff]
    %v2117 = vld [vmem:[%s8 + $0x1a0] sm:$0xf]
    %v2118 = vld [vmem:[%s8 + $0x1a4] sm:$0xff]
    %v2119 = vld [vmem:[%s8 + $0x1ac] sm:$0xff]
    %v2120 = vld [vmem:[%s8 + $0x1b4] sm:$0xff]
    %v2121 = vld [vmem:[%s8 + $0x1bc] sm:$0xf]
    %v2122 = vld [vmem:[%s8 + $0x1c0] sm:$0xff]
    %v2123 = vld [vmem:[%s8 + $0x1c8] sm:$0xff]
    %v2124 = vld [vmem:[%s8 + $0x1d0] sm:$0xff]
    %v2125 = vld [vmem:[%s8 + $0x1d8] sm:$0xf]
    %v2126 = vld [vmem:[%s8 + $0x1dc] sm:$0xff]
    %v2127 = vld [vmem:[%s8 + $0x1e4] sm:$0xff]
    %v2128 = vld [vmem:[%s8 + $0x1ec] sm:$0xff]
    %v2129 = vld [vmem:[%s8 + $0x1f4] sm:$0xf]
    %v2130 = vld [vmem:[%s8 + $0x1f8] sm:$0xff]
    %v2131 = vld [vmem:[%s8 + $0x200] sm:$0xff]
    %v2132 = vld [vmem:[%s8 + $0x208] sm:$0xff]
    %v2133 = vld [vmem:[%s8 + $0x210] sm:$0xf]
    %v2134 = vld [vmem:[%s8 + $0x214] sm:$0xff]
    %v2135 = vld [vmem:[%s8 + $0x21c] sm:$0xff]
    %v2136 = vld [vmem:[%s8 + $0x224] sm:$0xff]
    %v2137 = vld [vmem:[%s8 + $0x22c] sm:$0xf]
    %v2138 = vld [vmem:[%s8 + $0x230] sm:$0xff]
    %v2139 = vld [vmem:[%s8 + $0x238] sm:$0xff]
    %v2140 = vld [vmem:[%s8 + $0x240] sm:$0xff]
    %v2141 = vld [vmem:[%s8 + $0x248] sm:$0xf]
    %v2142 = vld [vmem:[%s8 + $0x24c] sm:$0xff]
    %v2143 = vld [vmem:[%s8 + $0x254] sm:$0xff]
    %v2144 = vld [vmem:[%s8 + $0x25c] sm:$0xff]
    %v2145 = vld [vmem:[%s8 + $0x264] sm:$0xf]
    %v2146 = vld [vmem:[%s8 + $0x268] sm:$0xff]
    %v2147 = vld [vmem:[%s8 + $0x270] sm:$0xff]
    %v2148 = vld [vmem:[%s8 + $0x278] sm:$0xff]
    %v2149 = vld [vmem:[%s8 + $0x280] sm:$0xf]
    %v2150 = vld [vmem:[%s8 + $0x284] sm:$0xff]
    %v2151 = vld [vmem:[%s8 + $0x28c] sm:$0xff]
    %v2152 = vld [vmem:[%s8 + $0x294] sm:$0xff]
    %v2153 = vld [vmem:[%s8 + $0x29c] sm:$0xf]
    %v2154 = vld [vmem:[%s8 + $0x2a0] sm:$0xff]
    %v2155 = vld [vmem:[%s8 + $0x2a8] sm:$0xff]
    %v2156 = vld [vmem:[%s8 + $0x2b0] sm:$0xff]
    %v2157 = vld [vmem:[%s8 + $0x2b8] sm:$0xf]
    %v2158 = vld [vmem:[%s8 + $0x2bc] sm:$0xff]
    %v2159 = vld [vmem:[%s8 + $0x2c4] sm:$0xff]
    %v2160 = vld [vmem:[%s8 + $0x2cc] sm:$0xff]
    %v2161 = vld [vmem:[%s8 + $0x2d4] sm:$0xf]
    %v2162 = vld [vmem:[%s8 + $0x2d8] sm:$0xff]
    %v2163 = vld [vmem:[%s8 + $0x2e0] sm:$0xff]
    %v2164 = vld [vmem:[%s8 + $0x2e8] sm:$0xff]
    %v2165 = vld [vmem:[%s8 + $0x2f0] sm:$0xf]
    %v2166 = vld [vmem:[%s8 + $0x2f4] sm:$0xff]
    %v2167 = vld [vmem:[%s8 + $0x2fc] sm:$0xff]
    %v2168 = vld [vmem:[%s8 + $0x304] sm:$0xff]
    %v2169 = vld [vmem:[%s8 + $0x30c] sm:$0xf]
    %v2170 = vld [vmem:[%s8 + $0x310] sm:$0xff]
    %v2171 = vld [vmem:[%s8 + $0x318] sm:$0xff]
    %v2172 = vld [vmem:[%s8 + $0x320] sm:$0xff]
    %v2173 = vld [vmem:[%s8 + $0x328] sm:$0xf]
    %v2174 = vld [vmem:[%s8 + $0x32c] sm:$0xff]
    %v2175 = vld [vmem:[%s8 + $0x334] sm:$0xff]
    %v2176 = vld [vmem:[%s8 + $0x33c] sm:$0xff]
    %v2177 = vld [vmem:[%s8 + $0x344] sm:$0xf]
    %v2178 = vld [vmem:[%s8 + $0x348] sm:$0xff]
    %v2179 = vld [vmem:[%s8 + $0x350] sm:$0xff]
    %v2180 = vld [vmem:[%s8 + $0x358] sm:$0xff]
    %v2181 = vld [vmem:[%s8 + $0x360] sm:$0xf]
    %v2182 = vld [vmem:[%s8 + $0x364] sm:$0xff]
    %v2183 = vld [vmem:[%s8 + $0x36c] sm:$0xff]
    %v2184 = vld [vmem:[%s8 + $0x374] sm:$0xff]
    %v2185 = vld [vmem:[%s8 + $0x37c] sm:$0xf]
    %v2186 = vld [vmem:[%s8 + $0x380] sm:$0xff]
    %v2187 = vld [vmem:[%s8 + $0x388] sm:$0xff]
    %v2188 = vld [vmem:[%s8 + $0x390] sm:$0xff]
    %v2189 = vld [vmem:[%s8 + $0x398] sm:$0xf]
    %v2190 = vld [vmem:[%s8 + $0x39c] sm:$0xff]
    %v2191 = vld [vmem:[%s8 + $0x3a4] sm:$0xff]
    %v2192 = vld [vmem:[%s8 + $0x3ac] sm:$0xff]
    %v2193 = vld [vmem:[%s8 + $0x3b4] sm:$0xf]
    %v2194 = vld [vmem:[%s8 + $0x3b8] sm:$0xff]
    %v2195 = vld [vmem:[%s8 + $0x3c0] sm:$0xff]
    %v2196 = vld [vmem:[%s8 + $0x3c8] sm:$0xff]
    %v2197 = vld [vmem:[%s8 + $0x3d0] sm:$0xf]
    %v2198 = vld [vmem:[%s8 + $0x3d4] sm:$0xff]
    %v2199 = vld [vmem:[%s8 + $0x3dc] sm:$0xff]
    %v2200 = vld [vmem:[%s8 + $0x3e4] sm:$0xff]
    %v2201 = vld [vmem:[%s8 + $0x3ec] sm:$0xf]
    %v2202 = vld [vmem:[%s8 + $0x3f0] sm:$0xff]
    %v2203 = vld [vmem:[%s8 + $0x3f8] sm:$0xff]
    %v2204 = vld [vmem:[%s8 + $0x400] sm:$0xff]
    %v2205 = vld [vmem:[%s8 + $0x408] sm:$0xf]
    %v2206 = vld [vmem:[%s8 + $0x40c] sm:$0xff]
    %v2207 = vld [vmem:[%s8 + $0x414] sm:$0xff]
    %v2208 = vld [vmem:[%s8 + $0x41c] sm:$0xff]
    %v2209 = vld [vmem:[%s8 + $0x424] sm:$0xf]
    %v2210 = vld [vmem:[%s8 + $0x428] sm:$0xff]
    %v2211 = vld [vmem:[%s8 + $0x430] sm:$0xff]
    %v2212 = vld [vmem:[%s8 + $0x438] sm:$0xff]
    %v2213 = vld [vmem:[%s8 + $0x440] sm:$0xf]
    %v2214 = vld [vmem:[%s8 + $0x444] sm:$0xff]
    %v2215 = vld [vmem:[%s8 + $0x44c] sm:$0xff]
    %v2216 = vld [vmem:[%s8 + $0x454] sm:$0xff]
    %v2217 = vld [vmem:[%s8 + $0x45c] sm:$0xf]
    %v2218 = vld [vmem:[%s8 + $0x460] sm:$0xff]
    %v2219 = vld [vmem:[%s8 + $0x468] sm:$0xff]
    %v2220 = vld [vmem:[%s8 + $0x470] sm:$0xff]
    %v2221 = vld [vmem:[%s8 + $0x478] sm:$0xf]
    %v2222 = vld [vmem:[%s8 + $0x47c] sm:$0xff]
    %v2223 = vld [vmem:[%s8 + $0x484] sm:$0xff]
    %v2224 = vld [vmem:[%s8 + $0x48c] sm:$0xff]
    %v2225 = vld [vmem:[%s8 + $0x494] sm:$0xf]
    %v2226 = vld [vmem:[%s8 + $0x498] sm:$0xff]
    %v2227 = vld [vmem:[%s8 + $0x4a0] sm:$0xff]
    %v2228 = vld [vmem:[%s8 + $0x4a8] sm:$0xff]
    %v2229 = vld [vmem:[%s8 + $0x4b0] sm:$0xf]
    %v2230 = vld [vmem:[%s8 + $0x4b4] sm:$0xff]
    %v2231 = vld [vmem:[%s8 + $0x4bc] sm:$0xff]
    %v2232 = vld [vmem:[%s8 + $0x4c4] sm:$0xff]
    %v2233 = vld [vmem:[%s8 + $0x4cc] sm:$0xf]
    %v2234 = vld [vmem:[%s8 + $0x4d0] sm:$0xff]
    %v2235 = vld [vmem:[%s8 + $0x4d8] sm:$0xff]
    %v2236 = vld [vmem:[%s8 + $0x4e0] sm:$0xff]
    %v2237 = vld [vmem:[%s8 + $0x4e8] sm:$0xf]
    %v2238 = vld [vmem:[%s8 + $0x4ec] sm:$0xff]
    %v2239 = vld [vmem:[%s8 + $0x4f4] sm:$0xff]
    %v2240 = vld [vmem:[%s8 + $0x4fc] sm:$0xff]
    %v2241 = vld [vmem:[%s8 + $0x504] sm:$0xf]
    %v2242 = vld [vmem:[%s8 + $0x508] sm:$0xff]
    %v2243 = vld [vmem:[%s8 + $0x510] sm:$0xff]
    %v2244 = vld [vmem:[%s8 + $0x518] sm:$0xff]
    %v2245 = vld [vmem:[%s8 + $0x520] sm:$0xf]
    %v2246 = vld [vmem:[%s8 + $0x524] sm:$0xff]
    %v2247 = vld [vmem:[%s8 + $0x52c] sm:$0xff]
    %v2248 = vld [vmem:[%s8 + $0x534] sm:$0xff]
    %v2249 = vld [vmem:[%s8 + $0x53c] sm:$0xf]
    %v2250 = vld [vmem:[%s8 + $0x540] sm:$0xff]
    %v2251 = vld [vmem:[%s8 + $0x548] sm:$0xff]
    %v2252 = vld [vmem:[%s8 + $0x550] sm:$0xff]
    %v2253 = vld [vmem:[%s8 + $0x558] sm:$0xf]
    %v2254 = vld [vmem:[%s8 + $0x55c] sm:$0xff]
    %v2255 = vld [vmem:[%s8 + $0x564] sm:$0xff]
    %v2256 = vld [vmem:[%s8 + $0x56c] sm:$0xff]
    %v2257 = vld [vmem:[%s8 + $0x574] sm:$0xf]
    %v2258 = vld [vmem:[%s9] sm:$0x7f]
    %v2260 = vlaneseq
    %v2261 = vshrl.u32 %v2260, 7
    %v2262 = vsub.s32 0, %v2261
    %v2263 = vrot.slane %v2258, %v2262
    %v2264 = vlaneseq
    %v2265 = vshrl.u32 %v2264, 7
    %v2266 = vsub.s32 1, %v2265
    %v2267 = vrot.slane %v2258, %v2266
    %v2268 = vlaneseq
    %v2269 = vshrl.u32 %v2268, 7
    %v2270 = vsub.s32 2, %v2269
    %v2271 = vrot.slane %v2258, %v2270
    %v2272 = vlaneseq
    %v2273 = vshrl.u32 %v2272, 7
    %v2274 = vsub.s32 3, %v2273
    %v2275 = vrot.slane %v2258, %v2274
    %v2276 = vlaneseq
    %v2277 = vshrl.u32 %v2276, 7
    %v2278 = vsub.s32 4, %v2277
    %v2279 = vrot.slane %v2258, %v2278
    %v2280 = vlaneseq
    %v2281 = vshrl.u32 %v2280, 7
    %v2282 = vsub.s32 5, %v2281
    %v2283 = vrot.slane %v2258, %v2282
    %v2284 = vlaneseq
    %v2285 = vshrl.u32 %v2284, 7
    %v2286 = vsub.s32 6, %v2285
    %v2287 = vrot.slane %v2258, %v2286
    %v2495 = vunpack.c.l.b16 %v2058
    %v2496 = vunpack.c.h.b16 %v2058
    %v2497 = vunpack.c.l.b16 %v2059
    %v2498 = vunpack.c.h.b16 %v2059
    %v2499 = vunpack.c.l.b16 %v2060
    %v2500 = vunpack.c.h.b16 %v2060
    %v2501 = vunpack.c.l.b16 %v2061
    %v2502 = vunpack.c.l.b16 %v2062
    %v2503 = vunpack.c.h.b16 %v2062
    %v2504 = vunpack.c.l.b16 %v2063
    %v2505 = vunpack.c.h.b16 %v2063
    %v2506 = vunpack.c.l.b16 %v2064
    %v2507 = vunpack.c.h.b16 %v2064
    %v2508 = vunpack.c.l.b16 %v2065
    %v2509 = vunpack.c.l.b16 %v2066
    %v2510 = vunpack.c.h.b16 %v2066
    %v2511 = vunpack.c.l.b16 %v2067
    %v2512 = vunpack.c.h.b16 %v2067
    %v2513 = vunpack.c.l.b16 %v2068
    %v2514 = vunpack.c.h.b16 %v2068
    %v2515 = vunpack.c.l.b16 %v2069
    %v2516 = vunpack.c.l.b16 %v2070
    %v2517 = vunpack.c.h.b16 %v2070
    %v2518 = vunpack.c.l.b16 %v2071
    %v2519 = vunpack.c.h.b16 %v2071
    %v2520 = vunpack.c.l.b16 %v2072
    %v2521 = vunpack.c.h.b16 %v2072
    %v2522 = vunpack.c.l.b16 %v2073
    %v2523 = vunpack.c.l.b16 %v2074
    %v2524 = vunpack.c.h.b16 %v2074
    %v2525 = vunpack.c.l.b16 %v2075
    %v2526 = vunpack.c.h.b16 %v2075
    %v2527 = vunpack.c.l.b16 %v2076
    %v2528 = vunpack.c.h.b16 %v2076
    %v2529 = vunpack.c.l.b16 %v2077
    %v2530 = vunpack.c.l.b16 %v2078
    %v2531 = vunpack.c.h.b16 %v2078
    %v2532 = vunpack.c.l.b16 %v2079
    %v2533 = vunpack.c.h.b16 %v2079
    %v2534 = vunpack.c.l.b16 %v2080
    %v2535 = vunpack.c.h.b16 %v2080
    %v2536 = vunpack.c.l.b16 %v2081
    %v2537 = vunpack.c.l.b16 %v2082
    %v2538 = vunpack.c.h.b16 %v2082
    %v2539 = vunpack.c.l.b16 %v2083
    %v2540 = vunpack.c.h.b16 %v2083
    %v2541 = vunpack.c.l.b16 %v2084
    %v2542 = vunpack.c.h.b16 %v2084
    %v2543 = vunpack.c.l.b16 %v2085
    %v2544 = vunpack.c.l.b16 %v2086
    %v2545 = vunpack.c.h.b16 %v2086
    %v2546 = vunpack.c.l.b16 %v2087
    %v2547 = vunpack.c.h.b16 %v2087
    %v2548 = vunpack.c.l.b16 %v2088
    %v2549 = vunpack.c.h.b16 %v2088
    %v2550 = vunpack.c.l.b16 %v2089
    %v2551 = vunpack.c.l.b16 %v2090
    %v2552 = vunpack.c.h.b16 %v2090
    %v2553 = vunpack.c.l.b16 %v2091
    %v2554 = vunpack.c.h.b16 %v2091
    %v2555 = vunpack.c.l.b16 %v2092
    %v2556 = vunpack.c.h.b16 %v2092
    %v2557 = vunpack.c.l.b16 %v2093
    %v2558 = vunpack.c.l.b16 %v2094
    %v2559 = vunpack.c.h.b16 %v2094
    %v2560 = vunpack.c.l.b16 %v2095
    %v2561 = vunpack.c.h.b16 %v2095
    %v2562 = vunpack.c.l.b16 %v2096
    %v2563 = vunpack.c.h.b16 %v2096
    %v2564 = vunpack.c.l.b16 %v2097
    %v2565 = vunpack.c.l.b16 %v2098
    %v2566 = vunpack.c.h.b16 %v2098
    %v2567 = vunpack.c.l.b16 %v2099
    %v2568 = vunpack.c.h.b16 %v2099
    %v2569 = vunpack.c.l.b16 %v2100
    %v2570 = vunpack.c.h.b16 %v2100
    %v2571 = vunpack.c.l.b16 %v2101
    %v2572 = vunpack.c.l.b16 %v2102
    %v2573 = vunpack.c.h.b16 %v2102
    %v2574 = vunpack.c.l.b16 %v2103
    %v2575 = vunpack.c.h.b16 %v2103
    %v2576 = vunpack.c.l.b16 %v2104
    %v2577 = vunpack.c.h.b16 %v2104
    %v2578 = vunpack.c.l.b16 %v2105
    %v2579 = vunpack.c.l.b16 %v2106
    %v2580 = vunpack.c.h.b16 %v2106
    %v2581 = vunpack.c.l.b16 %v2107
    %v2582 = vunpack.c.h.b16 %v2107
    %v2583 = vunpack.c.l.b16 %v2108
    %v2584 = vunpack.c.h.b16 %v2108
    %v2585 = vunpack.c.l.b16 %v2109
    %v2586 = vunpack.c.l.b16 %v2110
    %v2587 = vunpack.c.h.b16 %v2110
    %v2588 = vunpack.c.l.b16 %v2111
    %v2589 = vunpack.c.h.b16 %v2111
    %v2590 = vunpack.c.l.b16 %v2112
    %v2591 = vunpack.c.h.b16 %v2112
    %v2592 = vunpack.c.l.b16 %v2113
    %v2593 = vunpack.c.l.b16 %v2114
    %v2594 = vunpack.c.h.b16 %v2114
    %v2595 = vunpack.c.l.b16 %v2115
    %v2596 = vunpack.c.h.b16 %v2115
    %v2597 = vunpack.c.l.b16 %v2116
    %v2598 = vunpack.c.h.b16 %v2116
    %v2599 = vunpack.c.l.b16 %v2117
    %v2600 = vunpack.c.l.b16 %v2118
    %v2601 = vunpack.c.h.b16 %v2118
    %v2602 = vunpack.c.l.b16 %v2119
    %v2603 = vunpack.c.h.b16 %v2119
    %v2604 = vunpack.c.l.b16 %v2120
    %v2605 = vunpack.c.h.b16 %v2120
    %v2606 = vunpack.c.l.b16 %v2121
    %v2607 = vunpack.c.l.b16 %v2122
    %v2608 = vunpack.c.h.b16 %v2122
    %v2609 = vunpack.c.l.b16 %v2123
    %v2610 = vunpack.c.h.b16 %v2123
    %v2611 = vunpack.c.l.b16 %v2124
    %v2612 = vunpack.c.h.b16 %v2124
    %v2613 = vunpack.c.l.b16 %v2125
    %v2614 = vunpack.c.l.b16 %v2126
    %v2615 = vunpack.c.h.b16 %v2126
    %v2616 = vunpack.c.l.b16 %v2127
    %v2617 = vunpack.c.h.b16 %v2127
    %v2618 = vunpack.c.l.b16 %v2128
    %v2619 = vunpack.c.h.b16 %v2128
    %v2620 = vunpack.c.l.b16 %v2129
    %v2621 = vunpack.c.l.b16 %v2130
    %v2622 = vunpack.c.h.b16 %v2130
    %v2623 = vunpack.c.l.b16 %v2131
    %v2624 = vunpack.c.h.b16 %v2131
    %v2625 = vunpack.c.l.b16 %v2132
    %v2626 = vunpack.c.h.b16 %v2132
    %v2627 = vunpack.c.l.b16 %v2133
    %v2628 = vunpack.c.l.b16 %v2134
    %v2629 = vunpack.c.h.b16 %v2134
    %v2630 = vunpack.c.l.b16 %v2135
    %v2631 = vunpack.c.h.b16 %v2135
    %v2632 = vunpack.c.l.b16 %v2136
    %v2633 = vunpack.c.h.b16 %v2136
    %v2634 = vunpack.c.l.b16 %v2137
    %v2635 = vunpack.c.l.b16 %v2138
    %v2636 = vunpack.c.h.b16 %v2138
    %v2637 = vunpack.c.l.b16 %v2139
    %v2638 = vunpack.c.h.b16 %v2139
    %v2639 = vunpack.c.l.b16 %v2140
    %v2640 = vunpack.c.h.b16 %v2140
    %v2641 = vunpack.c.l.b16 %v2141
    %v2642 = vunpack.c.l.b16 %v2142
    %v2643 = vunpack.c.h.b16 %v2142
    %v2644 = vunpack.c.l.b16 %v2143
    %v2645 = vunpack.c.h.b16 %v2143
    %v2646 = vunpack.c.l.b16 %v2144
    %v2647 = vunpack.c.h.b16 %v2144
    %v2648 = vunpack.c.l.b16 %v2145
    %v2649 = vunpack.c.l.b16 %v2146
    %v2650 = vunpack.c.h.b16 %v2146
    %v2651 = vunpack.c.l.b16 %v2147
    %v2652 = vunpack.c.h.b16 %v2147
    %v2653 = vunpack.c.l.b16 %v2148
    %v2654 = vunpack.c.h.b16 %v2148
    %v2655 = vunpack.c.l.b16 %v2149
    %v2656 = vunpack.c.l.b16 %v2150
    %v2657 = vunpack.c.h.b16 %v2150
    %v2658 = vunpack.c.l.b16 %v2151
    %v2659 = vunpack.c.h.b16 %v2151
    %v2660 = vunpack.c.l.b16 %v2152
    %v2661 = vunpack.c.h.b16 %v2152
    %v2662 = vunpack.c.l.b16 %v2153
    %v2663 = vunpack.c.l.b16 %v2154
    %v2664 = vunpack.c.h.b16 %v2154
    %v2665 = vunpack.c.l.b16 %v2155
    %v2666 = vunpack.c.h.b16 %v2155
    %v2667 = vunpack.c.l.b16 %v2156
    %v2668 = vunpack.c.h.b16 %v2156
    %v2669 = vunpack.c.l.b16 %v2157
    %v2670 = vunpack.c.l.b16 %v2158
    %v2671 = vunpack.c.h.b16 %v2158
    %v2672 = vunpack.c.l.b16 %v2159
    %v2673 = vunpack.c.h.b16 %v2159
    %v2674 = vunpack.c.l.b16 %v2160
    %v2675 = vunpack.c.h.b16 %v2160
    %v2676 = vunpack.c.l.b16 %v2161
    %v2677 = vunpack.c.l.b16 %v2162
    %v2678 = vunpack.c.h.b16 %v2162
    %v2679 = vunpack.c.l.b16 %v2163
    %v2680 = vunpack.c.h.b16 %v2163
    %v2681 = vunpack.c.l.b16 %v2164
    %v2682 = vunpack.c.h.b16 %v2164
    %v2683 = vunpack.c.l.b16 %v2165
    %v2684 = vunpack.c.l.b16 %v2166
    %v2685 = vunpack.c.h.b16 %v2166
    %v2686 = vunpack.c.l.b16 %v2167
    %v2687 = vunpack.c.h.b16 %v2167
    %v2688 = vunpack.c.l.b16 %v2168
    %v2689 = vunpack.c.h.b16 %v2168
    %v2690 = vunpack.c.l.b16 %v2169
    %v2691 = vunpack.c.l.b16 %v2170
    %v2692 = vunpack.c.h.b16 %v2170
    %v2693 = vunpack.c.l.b16 %v2171
    %v2694 = vunpack.c.h.b16 %v2171
    %v2695 = vunpack.c.l.b16 %v2172
    %v2696 = vunpack.c.h.b16 %v2172
    %v2697 = vunpack.c.l.b16 %v2173
    %v2698 = vunpack.c.l.b16 %v2174
    %v2699 = vunpack.c.h.b16 %v2174
    %v2700 = vunpack.c.l.b16 %v2175
    %v2701 = vunpack.c.h.b16 %v2175
    %v2702 = vunpack.c.l.b16 %v2176
    %v2703 = vunpack.c.h.b16 %v2176
    %v2704 = vunpack.c.l.b16 %v2177
    %v2705 = vunpack.c.l.b16 %v2178
    %v2706 = vunpack.c.h.b16 %v2178
    %v2707 = vunpack.c.l.b16 %v2179
    %v2708 = vunpack.c.h.b16 %v2179
    %v2709 = vunpack.c.l.b16 %v2180
    %v2710 = vunpack.c.h.b16 %v2180
    %v2711 = vunpack.c.l.b16 %v2181
    %v2712 = vunpack.c.l.b16 %v2182
    %v2713 = vunpack.c.h.b16 %v2182
    %v2714 = vunpack.c.l.b16 %v2183
    %v2715 = vunpack.c.h.b16 %v2183
    %v2716 = vunpack.c.l.b16 %v2184
    %v2717 = vunpack.c.h.b16 %v2184
    %v2718 = vunpack.c.l.b16 %v2185
    %v2719 = vunpack.c.l.b16 %v2186
    %v2720 = vunpack.c.h.b16 %v2186
    %v2721 = vunpack.c.l.b16 %v2187
    %v2722 = vunpack.c.h.b16 %v2187
    %v2723 = vunpack.c.l.b16 %v2188
    %v2724 = vunpack.c.h.b16 %v2188
    %v2725 = vunpack.c.l.b16 %v2189
    %v2726 = vunpack.c.l.b16 %v2190
    %v2727 = vunpack.c.h.b16 %v2190
    %v2728 = vunpack.c.l.b16 %v2191
    %v2729 = vunpack.c.h.b16 %v2191
    %v2730 = vunpack.c.l.b16 %v2192
    %v2731 = vunpack.c.h.b16 %v2192
    %v2732 = vunpack.c.l.b16 %v2193
    %v2733 = vunpack.c.l.b16 %v2194
    %v2734 = vunpack.c.h.b16 %v2194
    %v2735 = vunpack.c.l.b16 %v2195
    %v2736 = vunpack.c.h.b16 %v2195
    %v2737 = vunpack.c.l.b16 %v2196
    %v2738 = vunpack.c.h.b16 %v2196
    %v2739 = vunpack.c.l.b16 %v2197
    %v2740 = vunpack.c.l.b16 %v2198
    %v2741 = vunpack.c.h.b16 %v2198
    %v2742 = vunpack.c.l.b16 %v2199
    %v2743 = vunpack.c.h.b16 %v2199
    %v2744 = vunpack.c.l.b16 %v2200
    %v2745 = vunpack.c.h.b16 %v2200
    %v2746 = vunpack.c.l.b16 %v2201
    %v2747 = vunpack.c.l.b16 %v2202
    %v2748 = vunpack.c.h.b16 %v2202
    %v2749 = vunpack.c.l.b16 %v2203
    %v2750 = vunpack.c.h.b16 %v2203
    %v2751 = vunpack.c.l.b16 %v2204
    %v2752 = vunpack.c.h.b16 %v2204
    %v2753 = vunpack.c.l.b16 %v2205
    %v2754 = vunpack.c.l.b16 %v2206
    %v2755 = vunpack.c.h.b16 %v2206
    %v2756 = vunpack.c.l.b16 %v2207
    %v2757 = vunpack.c.h.b16 %v2207
    %v2758 = vunpack.c.l.b16 %v2208
    %v2759 = vunpack.c.h.b16 %v2208
    %v2760 = vunpack.c.l.b16 %v2209
    %v2761 = vunpack.c.l.b16 %v2210
    %v2762 = vunpack.c.h.b16 %v2210
    %v2763 = vunpack.c.l.b16 %v2211
    %v2764 = vunpack.c.h.b16 %v2211
    %v2765 = vunpack.c.l.b16 %v2212
    %v2766 = vunpack.c.h.b16 %v2212
    %v2767 = vunpack.c.l.b16 %v2213
    %v2768 = vunpack.c.l.b16 %v2214
    %v2769 = vunpack.c.h.b16 %v2214
    %v2770 = vunpack.c.l.b16 %v2215
    %v2771 = vunpack.c.h.b16 %v2215
    %v2772 = vunpack.c.l.b16 %v2216
    %v2773 = vunpack.c.h.b16 %v2216
    %v2774 = vunpack.c.l.b16 %v2217
    %v2775 = vunpack.c.l.b16 %v2218
    %v2776 = vunpack.c.h.b16 %v2218
    %v2777 = vunpack.c.l.b16 %v2219
    %v2778 = vunpack.c.h.b16 %v2219
    %v2779 = vunpack.c.l.b16 %v2220
    %v2780 = vunpack.c.h.b16 %v2220
    %v2781 = vunpack.c.l.b16 %v2221
    %v2782 = vunpack.c.l.b16 %v2222
    %v2783 = vunpack.c.h.b16 %v2222
    %v2784 = vunpack.c.l.b16 %v2223
    %v2785 = vunpack.c.h.b16 %v2223
    %v2786 = vunpack.c.l.b16 %v2224
    %v2787 = vunpack.c.h.b16 %v2224
    %v2788 = vunpack.c.l.b16 %v2225
    %v2789 = vunpack.c.l.b16 %v2226
    %v2790 = vunpack.c.h.b16 %v2226
    %v2791 = vunpack.c.l.b16 %v2227
    %v2792 = vunpack.c.h.b16 %v2227
    %v2793 = vunpack.c.l.b16 %v2228
    %v2794 = vunpack.c.h.b16 %v2228
    %v2795 = vunpack.c.l.b16 %v2229
    %v2796 = vunpack.c.l.b16 %v2230
    %v2797 = vunpack.c.h.b16 %v2230
    %v2798 = vunpack.c.l.b16 %v2231
    %v2799 = vunpack.c.h.b16 %v2231
    %v2800 = vunpack.c.l.b16 %v2232
    %v2801 = vunpack.c.h.b16 %v2232
    %v2802 = vunpack.c.l.b16 %v2233
    %v2803 = vunpack.c.l.b16 %v2234
    %v2804 = vunpack.c.h.b16 %v2234
    %v2805 = vunpack.c.l.b16 %v2235
    %v2806 = vunpack.c.h.b16 %v2235
    %v2807 = vunpack.c.l.b16 %v2236
    %v2808 = vunpack.c.h.b16 %v2236
    %v2809 = vunpack.c.l.b16 %v2237
    %v2810 = vunpack.c.l.b16 %v2238
    %v2811 = vunpack.c.h.b16 %v2238
    %v2812 = vunpack.c.l.b16 %v2239
    %v2813 = vunpack.c.h.b16 %v2239
    %v2814 = vunpack.c.l.b16 %v2240
    %v2815 = vunpack.c.h.b16 %v2240
    %v2816 = vunpack.c.l.b16 %v2241
    %v2817 = vunpack.c.l.b16 %v2242
    %v2818 = vunpack.c.h.b16 %v2242
    %v2819 = vunpack.c.l.b16 %v2243
    %v2820 = vunpack.c.h.b16 %v2243
    %v2821 = vunpack.c.l.b16 %v2244
    %v2822 = vunpack.c.h.b16 %v2244
    %v2823 = vunpack.c.l.b16 %v2245
    %v2824 = vunpack.c.l.b16 %v2246
    %v2825 = vunpack.c.h.b16 %v2246
    %v2826 = vunpack.c.l.b16 %v2247
    %v2827 = vunpack.c.h.b16 %v2247
    %v2828 = vunpack.c.l.b16 %v2248
    %v2829 = vunpack.c.h.b16 %v2248
    %v2830 = vunpack.c.l.b16 %v2249
    %v2831 = vunpack.c.l.b16 %v2250
    %v2832 = vunpack.c.h.b16 %v2250
    %v2833 = vunpack.c.l.b16 %v2251
    %v2834 = vunpack.c.h.b16 %v2251
    %v2835 = vunpack.c.l.b16 %v2252
    %v2836 = vunpack.c.h.b16 %v2252
    %v2837 = vunpack.c.l.b16 %v2253
    %v2838 = vunpack.c.l.b16 %v2254
    %v2839 = vunpack.c.h.b16 %v2254
    %v2840 = vunpack.c.l.b16 %v2255
    %v2841 = vunpack.c.h.b16 %v2255
    %v2842 = vunpack.c.l.b16 %v2256
    %v2843 = vunpack.c.h.b16 %v2256
    %v2844 = vunpack.c.l.b16 %v2257
    %v2845 = vpack.c.b16 %v2502, %v2495
    %v2846 = vpack.c.b16 %v2503, %v2496
    %v2847 = vpack.c.b16 %v2504, %v2497
    %v2848 = vpack.c.b16 %v2505, %v2498
    %v2849 = vpack.c.b16 %v2506, %v2499
    %v2850 = vpack.c.b16 %v2507, %v2500
    %v2851 = vpack.c.b16 %v2508, %v2501
    %v2852 = vpack.c.b16 %v2516, %v2509
    %v2853 = vpack.c.b16 %v2517, %v2510
    %v2854 = vpack.c.b16 %v2518, %v2511
    %v2855 = vpack.c.b16 %v2519, %v2512
    %v2856 = vpack.c.b16 %v2520, %v2513
    %v2857 = vpack.c.b16 %v2521, %v2514
    %v2858 = vpack.c.b16 %v2522, %v2515
    %v2859 = vpack.c.b16 %v2530, %v2523
    %v2860 = vpack.c.b16 %v2531, %v2524
    %v2861 = vpack.c.b16 %v2532, %v2525
    %v2862 = vpack.c.b16 %v2533, %v2526
    %v2863 = vpack.c.b16 %v2534, %v2527
    %v2864 = vpack.c.b16 %v2535, %v2528
    %v2865 = vpack.c.b16 %v2536, %v2529
    %v2866 = vpack.c.b16 %v2544, %v2537
    %v2867 = vpack.c.b16 %v2545, %v2538
    %v2868 = vpack.c.b16 %v2546, %v2539
    %v2869 = vpack.c.b16 %v2547, %v2540
    %v2870 = vpack.c.b16 %v2548, %v2541
    %v2871 = vpack.c.b16 %v2549, %v2542
    %v2872 = vpack.c.b16 %v2550, %v2543
    %v2873 = vpack.c.b16 %v2558, %v2551
    %v2874 = vpack.c.b16 %v2559, %v2552
    %v2875 = vpack.c.b16 %v2560, %v2553
    %v2876 = vpack.c.b16 %v2561, %v2554
    %v2877 = vpack.c.b16 %v2562, %v2555
    %v2878 = vpack.c.b16 %v2563, %v2556
    %v2879 = vpack.c.b16 %v2564, %v2557
    %v2880 = vpack.c.b16 %v2572, %v2565
    %v2881 = vpack.c.b16 %v2573, %v2566
    %v2882 = vpack.c.b16 %v2574, %v2567
    %v2883 = vpack.c.b16 %v2575, %v2568
    %v2884 = vpack.c.b16 %v2576, %v2569
    %v2885 = vpack.c.b16 %v2577, %v2570
    %v2886 = vpack.c.b16 %v2578, %v2571
    %v2887 = vpack.c.b16 %v2586, %v2579
    %v2888 = vpack.c.b16 %v2587, %v2580
    %v2889 = vpack.c.b16 %v2588, %v2581
    %v2890 = vpack.c.b16 %v2589, %v2582
    %v2891 = vpack.c.b16 %v2590, %v2583
    %v2892 = vpack.c.b16 %v2591, %v2584
    %v2893 = vpack.c.b16 %v2592, %v2585
    %v2894 = vpack.c.b16 %v2600, %v2593
    %v2895 = vpack.c.b16 %v2601, %v2594
    %v2896 = vpack.c.b16 %v2602, %v2595
    %v2897 = vpack.c.b16 %v2603, %v2596
    %v2898 = vpack.c.b16 %v2604, %v2597
    %v2899 = vpack.c.b16 %v2605, %v2598
    %v2900 = vpack.c.b16 %v2606, %v2599
    %v2901 = vpack.c.b16 %v2614, %v2607
    %v2902 = vpack.c.b16 %v2615, %v2608
    %v2903 = vpack.c.b16 %v2616, %v2609
    %v2904 = vpack.c.b16 %v2617, %v2610
    %v2905 = vpack.c.b16 %v2618, %v2611
    %v2906 = vpack.c.b16 %v2619, %v2612
    %v2907 = vpack.c.b16 %v2620, %v2613
    %v2908 = vpack.c.b16 %v2628, %v2621
    %v2909 = vpack.c.b16 %v2629, %v2622
    %v2910 = vpack.c.b16 %v2630, %v2623
    %v2911 = vpack.c.b16 %v2631, %v2624
    %v2912 = vpack.c.b16 %v2632, %v2625
    %v2913 = vpack.c.b16 %v2633, %v2626
    %v2914 = vpack.c.b16 %v2634, %v2627
    %v2915 = vpack.c.b16 %v2642, %v2635
    %v2916 = vpack.c.b16 %v2643, %v2636
    %v2917 = vpack.c.b16 %v2644, %v2637
    %v2918 = vpack.c.b16 %v2645, %v2638
    %v2919 = vpack.c.b16 %v2646, %v2639
    %v2920 = vpack.c.b16 %v2647, %v2640
    %v2921 = vpack.c.b16 %v2648, %v2641
    %v2922 = vpack.c.b16 %v2656, %v2649
    %v2923 = vpack.c.b16 %v2657, %v2650
    %v2924 = vpack.c.b16 %v2658, %v2651
    %v2925 = vpack.c.b16 %v2659, %v2652
    %v2926 = vpack.c.b16 %v2660, %v2653
    %v2927 = vpack.c.b16 %v2661, %v2654
    %v2928 = vpack.c.b16 %v2662, %v2655
    %v2929 = vpack.c.b16 %v2670, %v2663
    %v2930 = vpack.c.b16 %v2671, %v2664
    %v2931 = vpack.c.b16 %v2672, %v2665
    %v2932 = vpack.c.b16 %v2673, %v2666
    %v2933 = vpack.c.b16 %v2674, %v2667
    %v2934 = vpack.c.b16 %v2675, %v2668
    %v2935 = vpack.c.b16 %v2676, %v2669
    %v2936 = vpack.c.b16 %v2684, %v2677
    %v2937 = vpack.c.b16 %v2685, %v2678
    %v2938 = vpack.c.b16 %v2686, %v2679
    %v2939 = vpack.c.b16 %v2687, %v2680
    %v2940 = vpack.c.b16 %v2688, %v2681
    %v2941 = vpack.c.b16 %v2689, %v2682
    %v2942 = vpack.c.b16 %v2690, %v2683
    %v2943 = vpack.c.b16 %v2698, %v2691
    %v2944 = vpack.c.b16 %v2699, %v2692
    %v2945 = vpack.c.b16 %v2700, %v2693
    %v2946 = vpack.c.b16 %v2701, %v2694
    %v2947 = vpack.c.b16 %v2702, %v2695
    %v2948 = vpack.c.b16 %v2703, %v2696
    %v2949 = vpack.c.b16 %v2704, %v2697
    %v2950 = vpack.c.b16 %v2712, %v2705
    %v2951 = vpack.c.b16 %v2713, %v2706
    %v2952 = vpack.c.b16 %v2714, %v2707
    %v2953 = vpack.c.b16 %v2715, %v2708
    %v2954 = vpack.c.b16 %v2716, %v2709
    %v2955 = vpack.c.b16 %v2717, %v2710
    %v2956 = vpack.c.b16 %v2718, %v2711
    %v2957 = vpack.c.b16 %v2726, %v2719
    %v2958 = vpack.c.b16 %v2727, %v2720
    %v2959 = vpack.c.b16 %v2728, %v2721
    %v2960 = vpack.c.b16 %v2729, %v2722
    %v2961 = vpack.c.b16 %v2730, %v2723
    %v2962 = vpack.c.b16 %v2731, %v2724
    %v2963 = vpack.c.b16 %v2732, %v2725
    %v2964 = vpack.c.b16 %v2740, %v2733
    %v2965 = vpack.c.b16 %v2741, %v2734
    %v2966 = vpack.c.b16 %v2742, %v2735
    %v2967 = vpack.c.b16 %v2743, %v2736
    %v2968 = vpack.c.b16 %v2744, %v2737
    %v2969 = vpack.c.b16 %v2745, %v2738
    %v2970 = vpack.c.b16 %v2746, %v2739
    %v2971 = vpack.c.b16 %v2754, %v2747
    %v2972 = vpack.c.b16 %v2755, %v2748
    %v2973 = vpack.c.b16 %v2756, %v2749
    %v2974 = vpack.c.b16 %v2757, %v2750
    %v2975 = vpack.c.b16 %v2758, %v2751
    %v2976 = vpack.c.b16 %v2759, %v2752
    %v2977 = vpack.c.b16 %v2760, %v2753
    %v2978 = vpack.c.b16 %v2768, %v2761
    %v2979 = vpack.c.b16 %v2769, %v2762
    %v2980 = vpack.c.b16 %v2770, %v2763
    %v2981 = vpack.c.b16 %v2771, %v2764
    %v2982 = vpack.c.b16 %v2772, %v2765
    %v2983 = vpack.c.b16 %v2773, %v2766
    %v2984 = vpack.c.b16 %v2774, %v2767
    %v2985 = vpack.c.b16 %v2782, %v2775
    %v2986 = vpack.c.b16 %v2783, %v2776
    %v2987 = vpack.c.b16 %v2784, %v2777
    %v2988 = vpack.c.b16 %v2785, %v2778
    %v2989 = vpack.c.b16 %v2786, %v2779
    %v2990 = vpack.c.b16 %v2787, %v2780
    %v2991 = vpack.c.b16 %v2788, %v2781
    %v2992 = vpack.c.b16 %v2796, %v2789
    %v2993 = vpack.c.b16 %v2797, %v2790
    %v2994 = vpack.c.b16 %v2798, %v2791
    %v2995 = vpack.c.b16 %v2799, %v2792
    %v2996 = vpack.c.b16 %v2800, %v2793
    %v2997 = vpack.c.b16 %v2801, %v2794
    %v2998 = vpack.c.b16 %v2802, %v2795
    %v2999 = vpack.c.b16 %v2810, %v2803
    %v3000 = vpack.c.b16 %v2811, %v2804
    %v3001 = vpack.c.b16 %v2812, %v2805
    %v3002 = vpack.c.b16 %v2813, %v2806
    %v3003 = vpack.c.b16 %v2814, %v2807
    %v3004 = vpack.c.b16 %v2815, %v2808
    %v3005 = vpack.c.b16 %v2816, %v2809
    %v3006 = vpack.c.b16 %v2824, %v2817
    %v3007 = vpack.c.b16 %v2825, %v2818
    %v3008 = vpack.c.b16 %v2826, %v2819
    %v3009 = vpack.c.b16 %v2827, %v2820
    %v3010 = vpack.c.b16 %v2828, %v2821
    %v3011 = vpack.c.b16 %v2829, %v2822
    %v3012 = vpack.c.b16 %v2830, %v2823
    %v3013 = vpack.c.b16 %v2838, %v2831
    %v3014 = vpack.c.b16 %v2839, %v2832
    %v3015 = vpack.c.b16 %v2840, %v2833
    %v3016 = vpack.c.b16 %v2841, %v2834
    %v3017 = vpack.c.b16 %v2842, %v2835
    %v3018 = vpack.c.b16 %v2843, %v2836
    %v3019 = vpack.c.b16 %v2844, %v2837
    %v3196 = vsel %vm1252, %v2057, 0
    %3198 = vmatprep.subr.bf16.mxu0 %v2846
    %3199 = vmatpush1.bf16.msra.mxu0 %v2845
    %3200 = vmatprep.subr.bf16.mxu0 %v2853
    %3201 = vmatpush1.bf16.msra.mxu0 %v2852
    %3202 = vmatprep.subr.bf16.mxu0 %v2860
    %3203 = vmatpush1.bf16.msra.mxu0 %v2859
    %3204 = vmatprep.subr.bf16.mxu0 %v2867
    %3205 = vmatpush1.bf16.msra.mxu0 %v2866
    %3206 = vmatprep.subr.bf16.mxu0 %v2874
    %3207 = vmatpush1.bf16.msra.mxu0 %v2873
    %3208 = vmatprep.subr.bf16.mxu0 %v2881
    %3209 = vmatpush1.bf16.msra.mxu0 %v2880
    %3210 = vmatprep.subr.bf16.mxu0 %v2888
    %3211 = vmatpush1.bf16.msra.mxu0 %v2887
    %3212 = vmatprep.subr.bf16.mxu0 %v2895
    %3213 = vmatpush1.bf16.msra.mxu0 %v2894
    %3214 = vmatprep.subr.bf16.mxu0 %v2902
    %3215 = vmatpush1.bf16.msra.mxu0 %v2901
    %3216 = vmatprep.subr.bf16.mxu0 %v2909
    %3217 = vmatpush1.bf16.msra.mxu0 %v2908
    %3218 = vmatprep.subr.bf16.mxu0 %v2916
    %3219 = vmatpush1.bf16.msra.mxu0 %v2915
    %3220 = vmatprep.subr.bf16.mxu0 %v2923
    %3221 = vmatpush1.bf16.msra.mxu0 %v2922
    %3222 = vmatprep.subr.bf16.mxu0 %v2930
    %3223 = vmatpush1.bf16.msra.mxu0 %v2929
    %3224 = vmatprep.subr.bf16.mxu0 %v2937
    %3225 = vmatpush1.bf16.msra.mxu0 %v2936
    %3226 = vmatprep.subr.bf16.mxu0 %v2944
    %3227 = vmatpush1.bf16.msra.mxu0 %v2943
    %3228 = vmatprep.subr.bf16.mxu0 %v2951
    %3229 = vmatpush1.bf16.msra.mxu0 %v2950
    %3230 = vmatprep.mubr.bf16.mxu0 %v2055
    %3231 = vmatmul.mubr.bf16.gmra.mrb[0].mxu0 %v2054
    %v3232 = vpop.f32.mrb[0].mxu0
    %v3233 = vadd.f32 %v2263, %v3232
    %v3234 = vpop.f32.mrb[0].mxu0
    %v3235 = vadd.f32 %v2267, %v3234
    %v3236 = vpop.f32.mrb[0].mxu0
    %v3237 = vpop.f32.mrb[0].mxu0
    %3238 = vdwg.mxu0
    %3239 = vmatprep.subr.bf16.mxu0 %v2958
    %3240 = vmatpush1.bf16.msra.mxu0 %v2957
    %3241 = vmatprep.subr.bf16.mxu0 %v2965
    %3242 = vmatpush1.bf16.msra.mxu0 %v2964
    %3243 = vmatprep.subr.bf16.mxu0 %v2972
    %3244 = vmatpush1.bf16.msra.mxu0 %v2971
    %3245 = vmatprep.subr.bf16.mxu0 %v2979
    %3246 = vmatpush1.bf16.msra.mxu0 %v2978
    %3247 = vmatprep.subr.bf16.mxu0 %v2986
    %3248 = vmatpush1.bf16.msra.mxu0 %v2985
    %3249 = vmatprep.subr.bf16.mxu0 %v2993
    %3250 = vmatpush1.bf16.msra.mxu0 %v2992
    %3251 = vmatprep.subr.bf16.mxu0 %v3000
    %3252 = vmatpush1.bf16.msra.mxu0 %v2999
    %3253 = vmatprep.subr.bf16.mxu0 %v3007
    %3254 = vmatpush1.bf16.msra.mxu0 %v3006
    %3255 = vmatprep.subr.bf16.mxu0 %v3014
    %3256 = vmatpush1.bf16.msra.mxu0 %v3013
    %3257 = vmatprep.subr.bf16.mxu0 0
    %3258 = vmatpush1.bf16.msra.mxu0 0
    %3259 = vmatprep.subr.bf16.mxu0 0
    %3260 = vmatpush1.bf16.msra.mxu0 0
    %3261 = vmatprep.subr.bf16.mxu0 0
    %3262 = vmatpush1.bf16.msra.mxu0 0
    %3263 = vmatprep.subr.bf16.mxu0 0
    %3264 = vmatpush1.bf16.msra.mxu0 0
    %3265 = vmatprep.subr.bf16.mxu0 0
    %3266 = vmatpush1.bf16.msra.mxu0 0
    %3267 = vmatprep.subr.bf16.mxu0 0
    %3268 = vmatpush1.bf16.msra.mxu0 0
    %3269 = vmatprep.subr.bf16.mxu0 0
    %3270 = vmatpush1.bf16.msra.mxu0 0
    %3271 = vmatprep.mubr.bf16.mxu0 %v3196
    %3272 = vmatmul.mubr.bf16.gmra.mrb[0].mxu0 %v2056
    %v3273 = vpop.f32.mrb[0].mxu0
    %v3274 = vadd.f32 %v3233, %v3273
    %v3275 = vpop.f32.mrb[0].mxu0
    %v3276 = vadd.f32 %v3235, %v3275
    %v3277 = vpop.f32.mrb[0].mxu0
    %v3278 = vpop.f32.mrb[0].mxu0
    %3279 = vdwg.mxu0
    %3280 = vmatprep.subr.bf16.mxu0 %v2848
    %3281 = vmatpush1.bf16.msra.mxu0 %v2847
    %3282 = vmatprep.subr.bf16.mxu0 %v2855
    %3283 = vmatpush1.bf16.msra.mxu0 %v2854
    %3284 = vmatprep.subr.bf16.mxu0 %v2862
    %3285 = vmatpush1.bf16.msra.mxu0 %v2861
    %3286 = vmatprep.subr.bf16.mxu0 %v2869
    %3287 = vmatpush1.bf16.msra.mxu0 %v2868
    %3288 = vmatprep.subr.bf16.mxu0 %v2876
    %3289 = vmatpush1.bf16.msra.mxu0 %v2875
    %3290 = vmatprep.subr.bf16.mxu0 %v2883
    %3291 = vmatpush1.bf16.msra.mxu0 %v2882
    %3292 = vmatprep.subr.bf16.mxu0 %v2890
    %3293 = vmatpush1.bf16.msra.mxu0 %v2889
    %3294 = vmatprep.subr.bf16.mxu0 %v2897
    %3295 = vmatpush1.bf16.msra.mxu0 %v2896
    %3296 = vmatprep.subr.bf16.mxu0 %v2904
    %3297 = vmatpush1.bf16.msra.mxu0 %v2903
    %3298 = vmatprep.subr.bf16.mxu0 %v2911
    %3299 = vmatpush1.bf16.msra.mxu0 %v2910
    %3300 = vmatprep.subr.bf16.mxu0 %v2918
    %3301 = vmatpush1.bf16.msra.mxu0 %v2917
    %3302 = vmatprep.subr.bf16.mxu0 %v2925
    %3303 = vmatpush1.bf16.msra.mxu0 %v2924
    %3304 = vmatprep.subr.bf16.mxu0 %v2932
    %3305 = vmatpush1.bf16.msra.mxu0 %v2931
    %3306 = vmatprep.subr.bf16.mxu0 %v2939
    %3307 = vmatpush1.bf16.msra.mxu0 %v2938
    %3308 = vmatprep.subr.bf16.mxu0 %v2946
    %3309 = vmatpush1.bf16.msra.mxu0 %v2945
    %3310 = vmatprep.subr.bf16.mxu0 %v2953
    %3311 = vmatpush1.bf16.msra.mxu0 %v2952
    %3312 = vmatprep.mubr.bf16.mxu0 %v2055
    %3313 = vmatmul.mubr.bf16.gmra.mrb[0].mxu0 %v2054
    %v3314 = vpop.f32.mrb[0].mxu0
    %v3315 = vadd.f32 %v2271, %v3314
    %v3316 = vpop.f32.mrb[0].mxu0
    %v3317 = vadd.f32 %v2275, %v3316
    %v3318 = vpop.f32.mrb[0].mxu0
    %v3319 = vpop.f32.mrb[0].mxu0
    %3320 = vdwg.mxu0
    %3321 = vmatprep.subr.bf16.mxu0 %v2960
    %3322 = vmatpush1.bf16.msra.mxu0 %v2959
    %3323 = vmatprep.subr.bf16.mxu0 %v2967
    %3324 = vmatpush1.bf16.msra.mxu0 %v2966
    %3325 = vmatprep.subr.bf16.mxu0 %v2974
    %3326 = vmatpush1.bf16.msra.mxu0 %v2973
    %3327 = vmatprep.subr.bf16.mxu0 %v2981
    %3328 = vmatpush1.bf16.msra.mxu0 %v2980
    %3329 = vmatprep.subr.bf16.mxu0 %v2988
    %3330 = vmatpush1.bf16.msra.mxu0 %v2987
    %3331 = vmatprep.subr.bf16.mxu0 %v2995
    %3332 = vmatpush1.bf16.msra.mxu0 %v2994
    %3333 = vmatprep.subr.bf16.mxu0 %v3002
    %3334 = vmatpush1.bf16.msra.mxu0 %v3001
    %3335 = vmatprep.subr.bf16.mxu0 %v3009
    %3336 = vmatpush1.bf16.msra.mxu0 %v3008
    %3337 = vmatprep.subr.bf16.mxu0 %v3016
    %3338 = vmatpush1.bf16.msra.mxu0 %v3015
    %3339 = vmatprep.subr.bf16.mxu0 0
    %3340 = vmatpush1.bf16.msra.mxu0 0
    %3341 = vmatprep.subr.bf16.mxu0 0
    %3342 = vmatpush1.bf16.msra.mxu0 0
    %3343 = vmatprep.subr.bf16.mxu0 0
    %3344 = vmatpush1.bf16.msra.mxu0 0
    %3345 = vmatprep.subr.bf16.mxu0 0
    %3346 = vmatpush1.bf16.msra.mxu0 0
    %3347 = vmatprep.subr.bf16.mxu0 0
    %3348 = vmatpush1.bf16.msra.mxu0 0
    %3349 = vmatprep.subr.bf16.mxu0 0
    %3350 = vmatpush1.bf16.msra.mxu0 0
    %3351 = vmatprep.subr.bf16.mxu0 0
    %3352 = vmatpush1.bf16.msra.mxu0 0
    %3353 = vmatprep.mubr.bf16.mxu0 %v3196
    %3354 = vmatmul.mubr.bf16.gmra.mrb[0].mxu0 %v2056
    %v3355 = vpop.f32.mrb[0].mxu0
    %v3356 = vadd.f32 %v3315, %v3355
    %v3357 = vpop.f32.mrb[0].mxu0
    %v3358 = vadd.f32 %v3317, %v3357
    %v3359 = vpop.f32.mrb[0].mxu0
    %v3360 = vpop.f32.mrb[0].mxu0
    %3361 = vdwg.mxu0
    %3362 = vmatprep.subr.bf16.mxu0 %v2850
    %3363 = vmatpush1.bf16.msra.mxu0 %v2849
    %3364 = vmatprep.subr.bf16.mxu0 %v2857
    %3365 = vmatpush1.bf16.msra.mxu0 %v2856
    %3366 = vmatprep.subr.bf16.mxu0 %v2864
    %3367 = vmatpush1.bf16.msra.mxu0 %v2863
    %3368 = vmatprep.subr.bf16.mxu0 %v2871
    %3369 = vmatpush1.bf16.msra.mxu0 %v2870
    %3370 = vmatprep.subr.bf16.mxu0 %v2878
    %3371 = vmatpush1.bf16.msra.mxu0 %v2877
    %3372 = vmatprep.subr.bf16.mxu0 %v2885
    %3373 = vmatpush1.bf16.msra.mxu0 %v2884
    %3374 = vmatprep.subr.bf16.mxu0 %v2892
    %3375 = vmatpush1.bf16.msra.mxu0 %v2891
    %3376 = vmatprep.subr.bf16.mxu0 %v2899
    %3377 = vmatpush1.bf16.msra.mxu0 %v2898
    %3378 = vmatprep.subr.bf16.mxu0 %v2906
    %3379 = vmatpush1.bf16.msra.mxu0 %v2905
    %3380 = vmatprep.subr.bf16.mxu0 %v2913
    %3381 = vmatpush1.bf16.msra.mxu0 %v2912
    %3382 = vmatprep.subr.bf16.mxu0 %v2920
    %3383 = vmatpush1.bf16.msra.mxu0 %v2919
    %3384 = vmatprep.subr.bf16.mxu0 %v2927
    %3385 = vmatpush1.bf16.msra.mxu0 %v2926
    %3386 = vmatprep.subr.bf16.mxu0 %v2934
    %3387 = vmatpush1.bf16.msra.mxu0 %v2933
    %3388 = vmatprep.subr.bf16.mxu0 %v2941
    %3389 = vmatpush1.bf16.msra.mxu0 %v2940
    %3390 = vmatprep.subr.bf16.mxu0 %v2948
    %3391 = vmatpush1.bf16.msra.mxu0 %v2947
    %3392 = vmatprep.subr.bf16.mxu0 %v2955
    %3393 = vmatpush1.bf16.msra.mxu0 %v2954
    %3394 = vmatprep.mubr.bf16.mxu0 %v2055
    %3395 = vmatmul.mubr.bf16.gmra.mrb[0].mxu0 %v2054
    %v3396 = vpop.f32.mrb[0].mxu0
    %v3397 = vadd.f32 %v2279, %v3396
    %v3398 = vpop.f32.mrb[0].mxu0
    %v3399 = vadd.f32 %v2283, %v3398
    %v3400 = vpop.f32.mrb[0].mxu0
    %v3401 = vpop.f32.mrb[0].mxu0
    %3402 = vdwg.mxu0
    %3403 = vmatprep.subr.bf16.mxu0 %v2962
    %3404 = vmatpush1.bf16.msra.mxu0 %v2961
    %3405 = vmatprep.subr.bf16.mxu0 %v2969
    %3406 = vmatpush1.bf16.msra.mxu0 %v2968
    %3407 = vmatprep.subr.bf16.mxu0 %v2976
    %3408 = vmatpush1.bf16.msra.mxu0 %v2975
    %3409 = vmatprep.subr.bf16.mxu0 %v2983
    %3410 = vmatpush1.bf16.msra.mxu0 %v2982
    %3411 = vmatprep.subr.bf16.mxu0 %v2990
    %3412 = vmatpush1.bf16.msra.mxu0 %v2989
    %3413 = vmatprep.subr.bf16.mxu0 %v2997
    %3414 = vmatpush1.bf16.msra.mxu0 %v2996
    %3415 = vmatprep.subr.bf16.mxu0 %v3004
    %3416 = vmatpush1.bf16.msra.mxu0 %v3003
    %3417 = vmatprep.subr.bf16.mxu0 %v3011
    %3418 = vmatpush1.bf16.msra.mxu0 %v3010
    %3419 = vmatprep.subr.bf16.mxu0 %v3018
    %3420 = vmatpush1.bf16.msra.mxu0 %v3017
    %3421 = vmatprep.subr.bf16.mxu0 0
    %3422 = vmatpush1.bf16.msra.mxu0 0
    %3423 = vmatprep.subr.bf16.mxu0 0
    %3424 = vmatpush1.bf16.msra.mxu0 0
    %3425 = vmatprep.subr.bf16.mxu0 0
    %3426 = vmatpush1.bf16.msra.mxu0 0
    %3427 = vmatprep.subr.bf16.mxu0 0
    %3428 = vmatpush1.bf16.msra.mxu0 0
    %3429 = vmatprep.subr.bf16.mxu0 0
    %3430 = vmatpush1.bf16.msra.mxu0 0
    %3431 = vmatprep.subr.bf16.mxu0 0
    %3432 = vmatpush1.bf16.msra.mxu0 0
    %3433 = vmatprep.subr.bf16.mxu0 0
    %3434 = vmatpush1.bf16.msra.mxu0 0
    %3435 = vmatprep.mubr.bf16.mxu0 %v3196
    %3436 = vmatmul.mubr.bf16.gmra.mrb[0].mxu0 %v2056
    %v3437 = vpop.f32.mrb[0].mxu0
    %v3438 = vadd.f32 %v3397, %v3437
    %v3439 = vpop.f32.mrb[0].mxu0
    %v3440 = vadd.f32 %v3399, %v3439
    %v3441 = vpop.f32.mrb[0].mxu0
    %v3442 = vpop.f32.mrb[0].mxu0
    %3443 = vdwg.mxu0
    %3444 = vmatprep.subr.bf16.mxu0 0
    %3445 = vmatpush1.bf16.msra.mxu0 %v2851
    %3446 = vmatprep.subr.bf16.mxu0 0
    %3447 = vmatpush1.bf16.msra.mxu0 %v2858
    %3448 = vmatprep.subr.bf16.mxu0 0
    %3449 = vmatpush1.bf16.msra.mxu0 %v2865
    %3450 = vmatprep.subr.bf16.mxu0 0
    %3451 = vmatpush1.bf16.msra.mxu0 %v2872
    %3452 = vmatprep.subr.bf16.mxu0 0
    %3453 = vmatpush1.bf16.msra.mxu0 %v2879
    %3454 = vmatprep.subr.bf16.mxu0 0
    %3455 = vmatpush1.bf16.msra.mxu0 %v2886
    %3456 = vmatprep.subr.bf16.mxu0 0
    %3457 = vmatpush1.bf16.msra.mxu0 %v2893
    %3458 = vmatprep.subr.bf16.mxu0 0
    %3459 = vmatpush1.bf16.msra.mxu0 %v2900
    %3460 = vmatprep.subr.bf16.mxu0 0
    %3461 = vmatpush1.bf16.msra.mxu0 %v2907
    %3462 = vmatprep.subr.bf16.mxu0 0
    %3463 = vmatpush1.bf16.msra.mxu0 %v2914
    %3464 = vmatprep.subr.bf16.mxu0 0
    %3465 = vmatpush1.bf16.msra.mxu0 %v2921
    %3466 = vmatprep.subr.bf16.mxu0 0
    %3467 = vmatpush1.bf16.msra.mxu0 %v2928
    %3468 = vmatprep.subr.bf16.mxu0 0
    %3469 = vmatpush1.bf16.msra.mxu0 %v2935
    %3470 = vmatprep.subr.bf16.mxu0 0
    %3471 = vmatpush1.bf16.msra.mxu0 %v2942
    %3472 = vmatprep.subr.bf16.mxu0 0
    %3473 = vmatpush1.bf16.msra.mxu0 %v2949
    %3474 = vmatprep.subr.bf16.mxu0 0
    %3475 = vmatpush1.bf16.msra.mxu0 %v2956
    %3476 = vmatprep.mubr.bf16.mxu0 %v2055
    %3477 = vmatmul.mubr.bf16.gmra.mrb[0].mxu0 %v2054
    %v3478 = vpop.f32.mrb[0].mxu0
    %v3479 = vadd.f32 %v2287, %v3478
    %v3480 = vpop.f32.mrb[0].mxu0
    %v3481 = vpop.f32.mrb[0].mxu0
    %v3482 = vpop.f32.mrb[0].mxu0
    %3483 = vdwg.mxu0
    %3484 = vmatprep.subr.bf16.mxu0 0
    %3485 = vmatpush1.bf16.msra.mxu0 %v2963
    %3486 = vmatprep.subr.bf16.mxu0 0
    %3487 = vmatpush1.bf16.msra.mxu0 %v2970
    %3488 = vmatprep.subr.bf16.mxu0 0
    %3489 = vmatpush1.bf16.msra.mxu0 %v2977
    %3490 = vmatprep.subr.bf16.mxu0 0
    %3491 = vmatpush1.bf16.msra.mxu0 %v2984
    %3492 = vmatprep.subr.bf16.mxu0 0
    %3493 = vmatpush1.bf16.msra.mxu0 %v2991
    %3494 = vmatprep.subr.bf16.mxu0 0
    %3495 = vmatpush1.bf16.msra.mxu0 %v2998
    %3496 = vmatprep.subr.bf16.mxu0 0
    %3497 = vmatpush1.bf16.msra.mxu0 %v3005
    %3498 = vmatprep.subr.bf16.mxu0 0
    %3499 = vmatpush1.bf16.msra.mxu0 %v3012
    %3500 = vmatprep.subr.bf16.mxu0 0
    %3501 = vmatpush1.bf16.msra.mxu0 %v3019
    %3502 = vmatprep.subr.bf16.mxu0 0
    %3503 = vmatpush1.bf16.msra.mxu0 0
    %3504 = vmatprep.subr.bf16.mxu0 0
    %3505 = vmatpush1.bf16.msra.mxu0 0
    %3506 = vmatprep.subr.bf16.mxu0 0
    %3507 = vmatpush1.bf16.msra.mxu0 0
    %3508 = vmatprep.subr.bf16.mxu0 0
    %3509 = vmatpush1.bf16.msra.mxu0 0
    %3510 = vmatprep.subr.bf16.mxu0 0
    %3511 = vmatpush1.bf16.msra.mxu0 0
    %3512 = vmatprep.subr.bf16.mxu0 0
    %3513 = vmatpush1.bf16.msra.mxu0 0
    %3514 = vmatprep.subr.bf16.mxu0 0
    %3515 = vmatpush1.bf16.msra.mxu0 0
    %3516 = vmatprep.mubr.bf16.mxu0 %v3196
    %3517 = vmatmul.mubr.bf16.gmra.mrb[0].mxu0 %v2056
    %v3518 = vpop.f32.mrb[0].mxu0
    %v3519 = vadd.f32 %v3479, %v3518
    %v3520 = vpop.f32.mrb[0].mxu0
    %v3521 = vpop.f32.mrb[0].mxu0
    %v3522 = vpop.f32.mrb[0].mxu0
    %3523 = vdwg.mxu0
    %v3524 = vmul.f32 %v3274, 0.5
    %v3525 = vmul.f32 %v3276, 0.5
    %v3526 = vmul.f32 %v3356, 0.5
    %v3527 = vmul.f32 %v3358, 0.5
    %v3528 = vmul.f32 %v3438, 0.5
    %v3529 = vmul.f32 %v3440, 0.5
    %v3530 = vmul.f32 %v3519, 0.5
    %v3531 = vtanh.pop %v3524
    %v3532 = vtanh.pop %v3525
    %v3533 = vtanh.pop %v3526
    %v3534 = vtanh.pop %v3527
    %v3535 = vtanh.pop %v3528
    %v3536 = vtanh.pop %v3529
    %v3537 = vtanh.pop %v3530
    %v3538 = vadd.f32 %v3531, 1.0
    %v3539 = vadd.f32 %v3532, 1.0
    %v3540 = vadd.f32 %v3533, 1.0
    %v3541 = vadd.f32 %v3534, 1.0
    %v3542 = vadd.f32 %v3535, 1.0
    %v3543 = vadd.f32 %v3536, 1.0
    %v3544 = vadd.f32 %v3537, 1.0
    %v3545 = vmul.f32 %v3538, 0.5
    %v3546 = vmul.f32 %v3539, 0.5
    %v3547 = vmul.f32 %v3540, 0.5
    %v3548 = vmul.f32 %v3541, 0.5
    %v3549 = vmul.f32 %v3542, 0.5
    %v3550 = vmul.f32 %v3543, 0.5
    %v3551 = vmul.f32 %v3544, 0.5
    %v3552 = vpack.c.bf16 %v3545, %v3545
    %v3553 = vpack.c.bf16 %v3546, %v3546
    %v3554 = vpack.c.bf16 %v3547, %v3547
    %v3555 = vpack.c.bf16 %v3548, %v3548
    %v3556 = vpack.c.bf16 %v3549, %v3549
    %v3557 = vpack.c.bf16 %v3550, %v3550
    %v3558 = vpack.c.bf16 %v3551, %v3551
    %v3566 = vunpack.c.l.b16 %v3552
    %v3567 = vunpack.c.l.b16 %v3553
    %v3568 = vunpack.c.l.b16 %v3554
    %v3569 = vunpack.c.l.b16 %v3555
    %v3570 = vunpack.c.l.b16 %v3556
    %v3571 = vunpack.c.l.b16 %v3557
    %v3572 = vunpack.c.l.b16 %v3558
    %v3573 = vpack.c.b16 %v3567, %v3566
    %v3574 = vpack.c.b16 %v3569, %v3568
    %v3575 = vpack.c.b16 %v3571, %v3570
    %v3576 = vpack.c.b16 %v3572, %v3572
    %3581 = vst [vmem:[#allocation2] sm:$0xff] %v3573
    %3582 = vst [vmem:[#allocation2 + $0x8] sm:$0xff] %v3574
    %3583 = vst [vmem:[#allocation2 + $0x10] sm:$0xff] %v3575
    %vm3584 = vcmask 125952
    %3585 = vst.msk [vmem:[#allocation2 + $0x18] sm:$0xf] %vm3584, %v3576
    %vm3586 = vcmask 326656
    %3587 = vst.msk [vmem:[#allocation4] sm:$0xff] %vm3586, %v1877
    // Predicated region
    $region42: #{tpu_custom_call.1} parent=1 // pred_check
      _
    $region43: #{tpu_custom_call.1} parent=1 // pred_check_branch
      %3589 = sbr.rel (0) target = $region45
    $region44: #{tpu_custom_call.1} parent=1 // pred_region
      %s3591 = ssub.s32 448, 448
      %3592 = vsyncadd [#allocation3], %s3591
      %s3594 = sshll.u32 [#allocation2], 4
      %s3595 = int_to_ptr.vmem [resolvable:$true] %s3594
      %3597 = dma.vmem_to_hbm [thread:$0]  %s3595, 448, %s10, [#allocation3]
    $region45: #{tpu_custom_call.1} parent=1 // pred_fallthru
      _
    // Predicated region
    $region46: #{tpu_custom_call.1} parent=1 // pred_check
      _
    $region47: #{tpu_custom_call.1} parent=1 // pred_check_branch
      %3599 = sbr.rel (0) target = $region49
    $region48: #{tpu_custom_call.1} parent=1 // pred_region
      %s3601 = ssub.s32 128, 128
      %3602 = vsyncadd [#allocation5], %s3601
      %s3604 = sshll.u32 [#allocation4], 4
      %s3605 = int_to_ptr.vmem [resolvable:$true] %s3604
      %3607 = dma.vmem_to_hbm [thread:$0]  %s3605, 128, %s11, [#allocation5]
    $region49: #{tpu_custom_call.1} parent=1 // pred_fallthru
      _
    // Predicated region
    $region50: #{tpu_custom_call.1} parent=1 // pred_check
      _
    $region51: #{tpu_custom_call.1} parent=1 // pred_check_branch
      %3609 = sbr.rel (0) target = $region53
    $region52: #{tpu_custom_call.1} parent=1 // pred_region
      %3610 = dma.done [#allocation3], 448
    $region53: #{tpu_custom_call.1} parent=1 // pred_fallthru
      _
    // Predicated region
    $region54: #{tpu_custom_call.1} parent=1 // pred_check
      _
    $region55: #{tpu_custom_call.1} parent=1 // pred_check_branch
      %3612 = sbr.rel (0) target = $region57
    $region56: #{tpu_custom_call.1} parent=1 // pred_region
      %3613 = dma.done [#allocation5], 128
    $region57: #{tpu_custom_call.1} parent=1 // pred_fallthru
      _
    %3614 = vsyncpa [#allocation3], 1
    %3615 = vsyncpa [#allocation5], 1

</llo_original>
